<compile_context>
chip_gen: v7x
topology: tpu7x:2x2x1
jax: 0.10.0
libtpu: 0.0.40
codegen_flags: <defaults>
</compile_context>

<pallas_src>
import functools
import math

import jax
import jax.numpy as jnp
from jax import lax
from jax.experimental import pallas as pl
from jax.experimental.pallas import tpu as pltpu

# ---- model config (small, consistent with a Qwen2-style attention block) ----
BATCH = 2
SEQ = 8
HIDDEN = 32
NUM_HEADS = 4
KV_HEADS = 2
HEAD_DIM = HIDDEN // NUM_HEADS      # 8
KV_WIDTH = KV_HEADS * HEAD_DIM      # 16
GROUP = NUM_HEADS // KV_HEADS       # 2


# ----------------------------- fused Pallas kernel ----------------------------
def _fused_attn_kernel(*refs, has_add):
    """One grid step = one batch element; everything stays resident in VMEM."""
    if has_add:
        (x_ref, add_ref, wq_ref, bq_ref, wk_ref, bk_ref, wv_ref, bv_ref,
         wo_ref, cos_ref, sin_ref, rot_ref,
         y_ref, aw_ref, kc_ref, vc_ref) = refs
    else:
        (x_ref, wq_ref, bq_ref, wk_ref, bk_ref, wv_ref, bv_ref,
         wo_ref, cos_ref, sin_ref, rot_ref,
         y_ref, aw_ref, kc_ref, vc_ref) = refs
        add_ref = None

    _, S, H = x_ref.shape
    n_heads = aw_ref.shape[1]
    kv_heads = kc_ref.shape[1]
    d = kc_ref.shape[3]
    group = n_heads // kv_heads
    kv_width = kv_heads * d

    x = x_ref[0]                                     # (S, H) lane-dense f32

    def linear(w_ref, b_ref=None):
        # y = x @ w.T (+ b): contract against the native (N, K) weight layout.
        y = lax.dot_general(x, w_ref[...], (((1,), (1,)), ((), ())),
                            preferred_element_type=jnp.float32)
        if b_ref is not None:
            y = y + b_ref[...]
        return y

    q = linear(wq_ref, bq_ref)                       # (S, nH*D)
    k = linear(wk_ref, bk_ref)                       # (S, kvH*D)
    v = linear(wv_ref, bv_ref)                       # (S, kvH*D)

    # --- RoPE (fused): rotate_half as a block-diagonal ±1 matmul (MXU),
    #     cos/sin tables pre-tiled per head so the elementwise part is a
    #     plain lane-dense VPU multiply-add.
    cos_q = cos_ref[...]                             # (S, nH*D)
    sin_q = sin_ref[...]
    rot_q = rot_ref[...]                             # (nH*D, nH*D) block-diag
    cos_k = cos_q[:, :kv_width]                      # per-head pattern repeats
    sin_k = sin_q[:, :kv_width]
    rot_k = rot_q[:kv_width, :kv_width]

    q = q * cos_q + jnp.dot(q, rot_q, preferred_element_type=jnp.float32) * sin_q
    k = k * cos_k + jnp.dot(k, rot_k, preferred_element_type=jnp.float32) * sin_k

    # --- causal softmax attention, all heads unrolled in this one grid step ---
    scale = jnp.float32(1.0 / math.sqrt(d))
    row = lax.broadcasted_iota(jnp.int32, (S, S), 0)
    col = lax.broadcasted_iota(jnp.int32, (S, S), 1)
    causal = col <= row

    head_outs = []
    for h in range(n_heads):
        g = h // group                               # GQA: shared kv head
        qh = q[:, h * d:(h + 1) * d]                 # (S, D)
        kh = k[:, g * d:(g + 1) * d]
        vh = v[:, g * d:(g + 1) * d]
        s = lax.dot_general(qh, kh, (((1,), (1,)), ((), ())),
                            preferred_element_type=jnp.float32) * scale
        s = jnp.where(causal, s, jnp.float32(-1e30))
        s = s - jnp.max(s, axis=-1, keepdims=True)
        p = jnp.exp(s)
        p = p / jnp.sum(p, axis=-1, keepdims=True)   # f32 softmax
        aw_ref[0, h] = p
        head_outs.append(jnp.dot(p, vh, preferred_element_type=jnp.float32))

    attn = jnp.concatenate(head_outs, axis=-1)       # (S, H) lane-dense
    y = lax.dot_general(attn, wo_ref[...], (((1,), (1,)), ((), ())),
                        preferred_element_type=jnp.float32)  # o_proj (no bias)
    if add_ref is not None:                          # fused residual add
        y = y + add_ref[0]
    y_ref[0] = y

    # past_key_value cache: post-RoPE k, plain v, in (kvH, S, D) layout.
    for j in range(kv_heads):
        kc_ref[0, j] = k[:, j * d:(j + 1) * d]
        vc_ref[0, j] = v[:, j * d:(j + 1) * d]


def _build_fused_call(B, S, H, n_heads, kv_heads, d, has_add):
    kvw = kv_heads * d
    kernel = functools.partial(_fused_attn_kernel, has_add=has_add)

    def full(shape):
        return pl.BlockSpec(shape, lambda b, _s=shape: tuple(0 for _ in _s))

    in_specs = [pl.BlockSpec((1, S, H), lambda b: (b, 0, 0))]      # x
    if has_add:
        in_specs.append(pl.BlockSpec((1, S, H), lambda b: (b, 0, 0)))
    in_specs += [
        full((H, H)), full((1, H)),        # wq, bq
        full((kvw, H)), full((1, kvw)),    # wk, bk
        full((kvw, H)), full((1, kvw)),    # wv, bv
        full((H, H)),                      # wo
        full((S, H)), full((S, H)),        # cos, sin (tiled per head)
        full((H, H)),                      # rotate_half block-diag matrix
    ]
    out_specs = (
        pl.BlockSpec((1, S, H), lambda b: (b, 0, 0)),
        pl.BlockSpec((1, n_heads, S, S), lambda b: (b, 0, 0, 0)),
        pl.BlockSpec((1, kv_heads, S, d), lambda b: (b, 0, 0, 0)),
        pl.BlockSpec((1, kv_heads, S, d), lambda b: (b, 0, 0, 0)),
    )
    out_shape = (
        jax.ShapeDtypeStruct((B, S, H), jnp.float32),
        jax.ShapeDtypeStruct((B, n_heads, S, S), jnp.float32),
        jax.ShapeDtypeStruct((B, kv_heads, S, d), jnp.float32),
        jax.ShapeDtypeStruct((B, kv_heads, S, d), jnp.float32),
    )
    return pl.pallas_call(
        kernel,
        out_shape=out_shape,
        grid=(B,),
        in_specs=in_specs,
        out_specs=out_specs,
        compiler_params=pltpu.CompilerParams(
            dimension_semantics=("parallel",)),
        cost_estimate=pl.CostEstimate(
            flops=200_000,
            transcendentals=B * n_heads * S * S,
            bytes_accessed=64 * 1024),
    )


# ------------------------------ RoPE constants --------------------------------
def _rope_tables(seq_len, dim, base=10000.0):
    inv_freq = 1.0 / (base ** (jnp.arange(0, dim, 2, dtype=jnp.float32) / dim))
    t = jnp.arange(seq_len, dtype=jnp.float32)
    freqs = jnp.outer(t, inv_freq)                    # (S, D/2)
    emb = jnp.concatenate([freqs, freqs], axis=-1)    # (S, D)
    return jnp.cos(emb), jnp.sin(emb)


def _rotate_half_matrix(dim):
    """R such that (x @ R) == concat(-x[dim//2:], x[:dim//2]) == rotate_half(x)."""
    half = dim // 2
    i = jnp.arange(half)
    r = jnp.zeros((dim, dim), jnp.float32)
    r = r.at[i + half, i].set(-1.0)
    r = r.at[i, i + half].set(1.0)
    return r


# -------------------------- Qwen2-style attention ------------------------------
def _qwen2_attn_forward(hidden_states, params, add_tensor):
    """Returns (attn_output, attn_weights, past_key_value) like HF Qwen2Attention.

    Single fused pallas_call: QKV proj + RoPE + causal GQA attention + o_proj
    (+ optional fused residual add)."""
    B, S, H = hidden_states.shape

    cos, sin = _rope_tables(S, HEAD_DIM)              # (S, D)
    cos_full = jnp.tile(cos, (1, NUM_HEADS))          # (S, H) — repeats per head
    sin_full = jnp.tile(sin, (1, NUM_HEADS))
    rot = jnp.kron(jnp.eye(NUM_HEADS, dtype=jnp.float32),
                   _rotate_half_matrix(HEAD_DIM))     # (H, H) block-diagonal

    has_add = add_tensor is not None
    call = _build_fused_call(B, S, H, NUM_HEADS, KV_HEADS, HEAD_DIM, has_add)

    args = [hidden_states.astype(jnp.float32)]
    if has_add:
        args.append(add_tensor.astype(jnp.float32))
    args += [
        params["wq"].astype(jnp.float32), params["bq"].reshape(1, H).astype(jnp.float32),
        params["wk"].astype(jnp.float32), params["bk"].reshape(1, KV_WIDTH).astype(jnp.float32),
        params["wv"].astype(jnp.float32), params["bv"].reshape(1, KV_WIDTH).astype(jnp.float32),
        params["wo"].astype(jnp.float32),
        cos_full, sin_full, rot,
    ]
    out, attn_weights, k_cache, v_cache = call(*args)
    return out, attn_weights, (k_cache, v_cache)


qwen2_attn_forward = jax.jit(_qwen2_attn_forward)


class Qwen2AttentionPallas:
    """Qwen2-style attention module, fully fused into one Pallas TPU kernel."""

    def __init__(self, params):
        self.params = params

    def __call__(self, hidden_states, add_tensor=None):
        return qwen2_attn_forward(hidden_states, self.params, add_tensor)


# ------------------------------ AttnWrapper ------------------------------------
class AttnWrapper:
    """JAX/Pallas port of the PyTorch AttnWrapper forward semantics.

    Perf: when `add_tensor` is set, the residual add is folded into the fused
    attention kernel (no separate add kernel / HBM round trip).  The result is
    identical to `output = (output[0] + add_tensor,) + output[1:]`.
    """

    def __init__(self, attn):
        self.attn = attn
        self.activations = None
        self.attn_weights = None
        self.key_value = None
        self.add_tensor = None

    def __call__(self, *args, **kwargs):
        if self.add_tensor is not None:
            output = self.attn(*args, add_tensor=self.add_tensor, **kwargs)
        else:
            output = self.attn(*args, **kwargs)
        self.activations = output[0]
        self.attn_weights = output[1]
        self.key_value = output[2]
        return output

    def reset(self):
        self.activations = None
        self.add_tensor = None


# ------------------------- pure-JAX reference (check) ---------------------------
def _reference_forward(hidden_states, params, add_tensor):
    B, S, H = hidden_states.shape
    with jax.default_matmul_precision("highest"):
        x2d = hidden_states.reshape(B * S, H)
        q = x2d @ params["wq"].T + params["bq"]
        k = x2d @ params["wk"].T + params["bk"]
        v = x2d @ params["wv"].T + params["bv"]
        q = q.reshape(B, S, NUM_HEADS, HEAD_DIM).transpose(0, 2, 1, 3)
        k = k.reshape(B, S, KV_HEADS, HEAD_DIM).transpose(0, 2, 1, 3)
        v = v.reshape(B, S, KV_HEADS, HEAD_DIM).transpose(0, 2, 1, 3)
        cos, sin = _rope_tables(S, HEAD_DIM)

        def rope(x):
            x1, x2 = jnp.split(x, 2, axis=-1)
            rot = jnp.concatenate([-x2, x1], axis=-1)
            return x * cos[None, None] + rot * sin[None, None]

        q, k = rope(q), rope(k)
        kr = jnp.repeat(k, GROUP, axis=1)
        vr = jnp.repeat(v, GROUP, axis=1)
        s = jnp.einsum("bhqd,bhkd->bhqk", q, kr) / math.sqrt(HEAD_DIM)
        mask = jnp.tril(jnp.ones((S, S), bool))
        s = jnp.where(mask, s, -1e30)
        p = jax.nn.softmax(s, axis=-1)
        o = jnp.einsum("bhqk,bhkd->bhqd", p, vr)
        o = (o.transpose(0, 2, 1, 3).reshape(B * S, H) @ params["wo"].T).reshape(B, S, H)
        if add_tensor is not None:
            o = o + add_tensor
    return o, p, (k, v)


# ---------------------------------- main ---------------------------------------
if __name__ == "__main__":
    key = jax.random.PRNGKey(0)
    ks = jax.random.split(key, 10)
    std = 0.02
    params = {
        "wq": std * jax.random.normal(ks[0], (HIDDEN, HIDDEN), jnp.float32),
        "bq": std * jax.random.normal(ks[1], (HIDDEN,), jnp.float32),
        "wk": std * jax.random.normal(ks[2], (KV_WIDTH, HIDDEN), jnp.float32),
        "bk": std * jax.random.normal(ks[3], (KV_WIDTH,), jnp.float32),
        "wv": std * jax.random.normal(ks[4], (KV_WIDTH, HIDDEN), jnp.float32),
        "bv": std * jax.random.normal(ks[5], (KV_WIDTH,), jnp.float32),
        "wo": std * jax.random.normal(ks[6], (HIDDEN, HIDDEN), jnp.float32),
    }

    hidden_states = jax.random.normal(ks[7], (BATCH, SEQ, HIDDEN), jnp.float32)
    add_tensor = 0.1 * jax.random.normal(ks[8], (BATCH, SEQ, HIDDEN), jnp.float32)

    wrapper = AttnWrapper(Qwen2AttentionPallas(params))
    wrapper.add_tensor = add_tensor

    output = wrapper(hidden_states)
    output = jax.block_until_ready(output)

    assert output[0].shape == (BATCH, SEQ, HIDDEN)
    assert output[1].shape == (BATCH, NUM_HEADS, SEQ, SEQ)
    assert output[2][0].shape == (BATCH, KV_HEADS, SEQ, HEAD_DIM)
    assert output[2][1].shape == (BATCH, KV_HEADS, SEQ, HEAD_DIM)
    assert wrapper.activations is output[0]

    # numerical check against a pure-JAX reference of the same forward
    ref_o, ref_w, (ref_k, ref_v) = _reference_forward(hidden_states, params, add_tensor)
    assert bool(jnp.allclose(output[0], ref_o, atol=5e-4, rtol=5e-3))
    assert bool(jnp.allclose(output[1], ref_w, atol=5e-4, rtol=5e-3))
    assert bool(jnp.allclose(output[2][0], ref_k, atol=5e-4, rtol=5e-3))
    assert bool(jnp.allclose(output[2][1], ref_v, atol=5e-4, rtol=5e-3))

    print("KERNEL_OK")
</pallas_src>

<mosaic_0001>
module attributes {stable_mosaic.version = 11 : i64} {
  func.func @_fused_attn_kernel(%arg0: i32, %arg1: memref<1x8x32xf32, #tpu.memory_space<vmem>>, %arg2: memref<1x8x32xf32, #tpu.memory_space<vmem>>, %arg3: memref<32x32xf32, #tpu.memory_space<vmem>>, %arg4: memref<1x32xf32, #tpu.memory_space<vmem>>, %arg5: memref<16x32xf32, #tpu.memory_space<vmem>>, %arg6: memref<1x16xf32, #tpu.memory_space<vmem>>, %arg7: memref<16x32xf32, #tpu.memory_space<vmem>>, %arg8: memref<1x16xf32, #tpu.memory_space<vmem>>, %arg9: memref<32x32xf32, #tpu.memory_space<vmem>>, %arg10: memref<8x32xf32, #tpu.memory_space<vmem>>, %arg11: memref<8x32xf32, #tpu.memory_space<vmem>>, %arg12: memref<32x32xf32, #tpu.memory_space<vmem>>, %arg13: memref<1x8x32xf32, #tpu.memory_space<vmem>>, %arg14: memref<1x4x8x8xf32, #tpu.memory_space<vmem>>, %arg15: memref<1x2x8x8xf32, #tpu.memory_space<vmem>>, %arg16: memref<1x2x8x8xf32, #tpu.memory_space<vmem>>) attributes {dimension_semantics = [#tpu.dimension_semantics<parallel>], iteration_bounds = array<i64: 2>, scalar_prefetch = 0 : i64, scratch_operands = 0 : i64, tpu.core_type = #tpu.core_type<tc>, window_params = [{transform_indices = @transform_0, window_bounds = array<i64: 1, 8, 32>}, {transform_indices = @transform_1, window_bounds = array<i64: 1, 8, 32>}, {pipeline_mode = #tpu.pipeline_mode<synchronous>, transform_indices = @transform_2, window_bounds = array<i64: 32, 32>}, {pipeline_mode = #tpu.pipeline_mode<synchronous>, transform_indices = @transform_3, window_bounds = array<i64: 1, 32>}, {pipeline_mode = #tpu.pipeline_mode<synchronous>, transform_indices = @transform_4, window_bounds = array<i64: 16, 32>}, {pipeline_mode = #tpu.pipeline_mode<synchronous>, transform_indices = @transform_5, window_bounds = array<i64: 1, 16>}, {pipeline_mode = #tpu.pipeline_mode<synchronous>, transform_indices = @transform_6, window_bounds = array<i64: 16, 32>}, {pipeline_mode = #tpu.pipeline_mode<synchronous>, transform_indices = @transform_7, window_bounds = array<i64: 1, 16>}, {pipeline_mode = #tpu.pipeline_mode<synchronous>, transform_indices = @transform_8, window_bounds = array<i64: 32, 32>}, {pipeline_mode = #tpu.pipeline_mode<synchronous>, transform_indices = @transform_9, window_bounds = array<i64: 8, 32>}, {pipeline_mode = #tpu.pipeline_mode<synchronous>, transform_indices = @transform_10, window_bounds = array<i64: 8, 32>}, {pipeline_mode = #tpu.pipeline_mode<synchronous>, transform_indices = @transform_11, window_bounds = array<i64: 32, 32>}, {transform_indices = @transform_12, window_bounds = array<i64: 1, 8, 32>}, {transform_indices = @transform_13, window_bounds = array<i64: 1, 4, 8, 8>}, {transform_indices = @transform_14, window_bounds = array<i64: 1, 2, 8, 8>}, {transform_indices = @transform_15, window_bounds = array<i64: 1, 2, 8, 8>}]} {
    %c0 = arith.constant 0 : index
    %c0_0 = arith.constant 0 : index
    %c0_1 = arith.constant 0 : index
    %0 = vector.load %arg1[%c0, %c0_0, %c0_1] : memref<1x8x32xf32, #tpu.memory_space<vmem>>, vector<1x8x32xf32>
    %1 = vector.shape_cast %0 : vector<1x8x32xf32> to vector<8x32xf32>
    %c0_2 = arith.constant 0 : index
    %c0_3 = arith.constant 0 : index
    %2 = vector.load %arg3[%c0_2, %c0_3] : memref<32x32xf32, #tpu.memory_space<vmem>>, vector<32x32xf32>
    %cst = arith.constant dense<0.000000e+00> : vector<8x32xf32>
    %3 = tpu.matmul %1, %2, %cst {dimension_numbers = #tpu.dot_dimension_numbers<[1], [1], [0], [0], [0, 0, 1, 0], [], []>} : vector<8x32xf32>, vector<32x32xf32>, vector<8x32xf32> -> vector<8x32xf32>
    %c0_4 = arith.constant 0 : index
    %c0_5 = arith.constant 0 : index
    %4 = vector.load %arg4[%c0_4, %c0_5] : memref<1x32xf32, #tpu.memory_space<vmem>>, vector<1x32xf32>
    %5 = vector.broadcast %4 : vector<1x32xf32> to vector<8x32xf32>
    %6 = arith.addf %3, %5 : vector<8x32xf32>
    %c0_6 = arith.constant 0 : index
    %c0_7 = arith.constant 0 : index
    %7 = vector.load %arg5[%c0_6, %c0_7] : memref<16x32xf32, #tpu.memory_space<vmem>>, vector<16x32xf32>
    %cst_8 = arith.constant dense<0.000000e+00> : vector<8x16xf32>
    %8 = tpu.matmul %1, %7, %cst_8 {dimension_numbers = #tpu.dot_dimension_numbers<[1], [1], [0], [0], [0, 0, 1, 0], [], []>} : vector<8x32xf32>, vector<16x32xf32>, vector<8x16xf32> -> vector<8x16xf32>
    %c0_9 = arith.constant 0 : index
    %c0_10 = arith.constant 0 : index
    %9 = vector.load %arg6[%c0_9, %c0_10] : memref<1x16xf32, #tpu.memory_space<vmem>>, vector<1x16xf32>
    %10 = vector.broadcast %9 : vector<1x16xf32> to vector<8x16xf32>
    %11 = arith.addf %8, %10 : vector<8x16xf32>
    %c0_11 = arith.constant 0 : index
    %c0_12 = arith.constant 0 : index
    %12 = vector.load %arg7[%c0_11, %c0_12] : memref<16x32xf32, #tpu.memory_space<vmem>>, vector<16x32xf32>
    %cst_13 = arith.constant dense<0.000000e+00> : vector<8x16xf32>
    %13 = tpu.matmul %1, %12, %cst_13 {dimension_numbers = #tpu.dot_dimension_numbers<[1], [1], [0], [0], [0, 0, 1, 0], [], []>} : vector<8x32xf32>, vector<16x32xf32>, vector<8x16xf32> -> vector<8x16xf32>
    %c0_14 = arith.constant 0 : index
    %c0_15 = arith.constant 0 : index
    %14 = vector.load %arg8[%c0_14, %c0_15] : memref<1x16xf32, #tpu.memory_space<vmem>>, vector<1x16xf32>
    %15 = vector.broadcast %14 : vector<1x16xf32> to vector<8x16xf32>
    %16 = arith.addf %13, %15 : vector<8x16xf32>
    %c0_16 = arith.constant 0 : index
    %c0_17 = arith.constant 0 : index
    %17 = vector.load %arg10[%c0_16, %c0_17] : memref<8x32xf32, #tpu.memory_space<vmem>>, vector<8x32xf32>
    %c0_18 = arith.constant 0 : index
    %c0_19 = arith.constant 0 : index
    %18 = vector.load %arg11[%c0_18, %c0_19] : memref<8x32xf32, #tpu.memory_space<vmem>>, vector<8x32xf32>
    %c0_20 = arith.constant 0 : index
    %c0_21 = arith.constant 0 : index
    %19 = vector.load %arg12[%c0_20, %c0_21] : memref<32x32xf32, #tpu.memory_space<vmem>>, vector<32x32xf32>
    %20 = vector.extract_strided_slice %17 {offsets = [0, 0], sizes = [8, 16], strides = [1, 1]} : vector<8x32xf32> to vector<8x16xf32>
    %21 = vector.extract_strided_slice %18 {offsets = [0, 0], sizes = [8, 16], strides = [1, 1]} : vector<8x32xf32> to vector<8x16xf32>
    %22 = vector.extract_strided_slice %19 {offsets = [0, 0], sizes = [16, 16], strides = [1, 1]} : vector<32x32xf32> to vector<16x16xf32>
    %23 = arith.mulf %6, %17 : vector<8x32xf32>
    %cst_22 = arith.constant dense<0.000000e+00> : vector<8x32xf32>
    %24 = tpu.matmul %6, %19, %cst_22 {dimension_numbers = #tpu.dot_dimension_numbers<[1], [0], [0], [1], [0, 0, 1, 1], [], []>} : vector<8x32xf32>, vector<32x32xf32>, vector<8x32xf32> -> vector<8x32xf32>
    %25 = arith.mulf %24, %18 : vector<8x32xf32>
    %26 = arith.addf %23, %25 : vector<8x32xf32>
    %27 = arith.mulf %11, %20 : vector<8x16xf32>
    %cst_23 = arith.constant dense<0.000000e+00> : vector<8x16xf32>
    %28 = tpu.matmul %11, %22, %cst_23 {dimension_numbers = #tpu.dot_dimension_numbers<[1], [0], [0], [1], [0, 0, 1, 1], [], []>} : vector<8x16xf32>, vector<16x16xf32>, vector<8x16xf32> -> vector<8x16xf32>
    %29 = arith.mulf %28, %21 : vector<8x16xf32>
    %30 = arith.addf %27, %29 : vector<8x16xf32>
    %31 = tpu.iota {dimensions = array<i32: 0>} : vector<8x8xi32>
    %32 = tpu.iota {dimensions = array<i32: 1>} : vector<8x8xi32>
    %33 = arith.cmpi sle, %32, %31 : vector<8x8xi32>
    %34 = vector.extract_strided_slice %26 {offsets = [0, 0], sizes = [8, 8], strides = [1, 1]} : vector<8x32xf32> to vector<8x8xf32>
    %35 = vector.extract_strided_slice %30 {offsets = [0, 0], sizes = [8, 8], strides = [1, 1]} : vector<8x16xf32> to vector<8x8xf32>
    %36 = vector.extract_strided_slice %16 {offsets = [0, 0], sizes = [8, 8], strides = [1, 1]} : vector<8x16xf32> to vector<8x8xf32>
    %cst_24 = arith.constant dense<0.000000e+00> : vector<8x8xf32>
    %37 = tpu.matmul %34, %35, %cst_24 {dimension_numbers = #tpu.dot_dimension_numbers<[1], [1], [0], [0], [0, 0, 1, 0], [], []>} : vector<8x8xf32>, vector<8x8xf32>, vector<8x8xf32> -> vector<8x8xf32>
    %cst_25 = arith.constant 0.353553385 : f32
    %38 = vector.broadcast %cst_25 : f32 to vector<8x8xf32>
    %39 = arith.mulf %37, %38 : vector<8x8xf32>
    %cst_26 = arith.constant -1.000000e+30 : f32
    %40 = vector.broadcast %cst_26 : f32 to vector<8x8xf32>
    %41 = arith.select %33, %39, %40 : vector<8x8xi1>, vector<8x8xf32>
    %cst_27 = arith.constant dense<0xFF800000> : vector<8xf32>
    %42 = vector.multi_reduction <maximumf>, %41, %cst_27 [1] : vector<8x8xf32> to vector<8xf32>
    %43 = vector.shape_cast %42 : vector<8xf32> to vector<8x1xf32>
    %44 = vector.broadcast %43 : vector<8x1xf32> to vector<8x8xf32>
    %45 = arith.subf %41, %44 : vector<8x8xf32>
    %46 = math.exp %45 : vector<8x8xf32>
    %cst_28 = arith.constant dense<0.000000e+00> : vector<8xf32>
    %47 = vector.multi_reduction <add>, %46, %cst_28 [1] : vector<8x8xf32> to vector<8xf32>
    %48 = vector.shape_cast %47 : vector<8xf32> to vector<8x1xf32>
    %49 = vector.broadcast %48 : vector<8x1xf32> to vector<8x8xf32>
    %50 = arith.divf %46, %49 : vector<8x8xf32>
    %c0_29 = arith.constant 0 : index
    %c0_30 = arith.constant 0 : index
    %c0_31 = arith.constant 0 : index
    %c0_32 = arith.constant 0 : index
    %51 = vector.load %arg14[%c0_29, %c0_30, %c0_31, %c0_32] : memref<1x4x8x8xf32, #tpu.memory_space<vmem>>, vector<1x1x8x8xf32>
    %52 = vector.shape_cast %51 : vector<1x1x8x8xf32> to vector<8x8xf32>
    %53 = vector.shape_cast %50 : vector<8x8xf32> to vector<1x1x8x8xf32>
    tpu.vector_store %arg14[%c0_29, %c0_30, %c0_31, %c0_32], %53 {strides = array<i32>} : memref<1x4x8x8xf32, #tpu.memory_space<vmem>>, vector<1x1x8x8xf32>,
    %cst_33 = arith.constant dense<0.000000e+00> : vector<8x8xf32>
    %54 = tpu.matmul %50, %36, %cst_33 {dimension_numbers = #tpu.dot_dimension_numbers<[1], [0], [0], [1], [0, 0, 1, 1], [], []>} : vector<8x8xf32>, vector<8x8xf32>, vector<8x8xf32> -> vector<8x8xf32>
    %55 = vector.extract_strided_slice %26 {offsets = [0, 8], sizes = [8, 8], strides = [1, 1]} : vector<8x32xf32> to vector<8x8xf32>
    %56 = vector.extract_strided_slice %30 {offsets = [0, 0], sizes = [8, 8], strides = [1, 1]} : vector<8x16xf32> to vector<8x8xf32>
    %57 = vector.extract_strided_slice %16 {offsets = [0, 0], sizes = [8, 8], strides = [1, 1]} : vector<8x16xf32> to vector<8x8xf32>
    %cst_34 = arith.constant dense<0.000000e+00> : vector<8x8xf32>
    %58 = tpu.matmul %55, %56, %cst_34 {dimension_numbers = #tpu.dot_dimension_numbers<[1], [1], [0], [0], [0, 0, 1, 0], [], []>} : vector<8x8xf32>, vector<8x8xf32>, vector<8x8xf32> -> vector<8x8xf32>
    %cst_35 = arith.constant 0.353553385 : f32
    %59 = vector.broadcast %cst_35 : f32 to vector<8x8xf32>
    %60 = arith.mulf %58, %59 : vector<8x8xf32>
    %cst_36 = arith.constant -1.000000e+30 : f32
    %61 = vector.broadcast %cst_36 : f32 to vector<8x8xf32>
    %62 = arith.select %33, %60, %61 : vector<8x8xi1>, vector<8x8xf32>
    %cst_37 = arith.constant dense<0xFF800000> : vector<8xf32>
    %63 = vector.multi_reduction <maximumf>, %62, %cst_37 [1] : vector<8x8xf32> to vector<8xf32>
    %64 = vector.shape_cast %63 : vector<8xf32> to vector<8x1xf32>
    %65 = vector.broadcast %64 : vector<8x1xf32> to vector<8x8xf32>
    %66 = arith.subf %62, %65 : vector<8x8xf32>
    %67 = math.exp %66 : vector<8x8xf32>
    %cst_38 = arith.constant dense<0.000000e+00> : vector<8xf32>
    %68 = vector.multi_reduction <add>, %67, %cst_38 [1] : vector<8x8xf32> to vector<8xf32>
    %69 = vector.shape_cast %68 : vector<8xf32> to vector<8x1xf32>
    %70 = vector.broadcast %69 : vector<8x1xf32> to vector<8x8xf32>
    %71 = arith.divf %67, %70 : vector<8x8xf32>
    %c0_39 = arith.constant 0 : index
    %c1 = arith.constant 1 : index
    %c0_40 = arith.constant 0 : index
    %c0_41 = arith.constant 0 : index
    %72 = vector.load %arg14[%c0_39, %c1, %c0_40, %c0_41] : memref<1x4x8x8xf32, #tpu.memory_space<vmem>>, vector<1x1x8x8xf32>
    %73 = vector.shape_cast %72 : vector<1x1x8x8xf32> to vector<8x8xf32>
    %74 = vector.shape_cast %71 : vector<8x8xf32> to vector<1x1x8x8xf32>
    tpu.vector_store %arg14[%c0_39, %c1, %c0_40, %c0_41], %74 {strides = array<i32>} : memref<1x4x8x8xf32, #tpu.memory_space<vmem>>, vector<1x1x8x8xf32>,
    %cst_42 = arith.constant dense<0.000000e+00> : vector<8x8xf32>
    %75 = tpu.matmul %71, %57, %cst_42 {dimension_numbers = #tpu.dot_dimension_numbers<[1], [0], [0], [1], [0, 0, 1, 1], [], []>} : vector<8x8xf32>, vector<8x8xf32>, vector<8x8xf32> -> vector<8x8xf32>
    %76 = vector.extract_strided_slice %26 {offsets = [0, 16], sizes = [8, 8], strides = [1, 1]} : vector<8x32xf32> to vector<8x8xf32>
    %77 = vector.extract_strided_slice %30 {offsets = [0, 8], sizes = [8, 8], strides = [1, 1]} : vector<8x16xf32> to vector<8x8xf32>
    %78 = vector.extract_strided_slice %16 {offsets = [0, 8], sizes = [8, 8], strides = [1, 1]} : vector<8x16xf32> to vector<8x8xf32>
    %cst_43 = arith.constant dense<0.000000e+00> : vector<8x8xf32>
    %79 = tpu.matmul %76, %77, %cst_43 {dimension_numbers = #tpu.dot_dimension_numbers<[1], [1], [0], [0], [0, 0, 1, 0], [], []>} : vector<8x8xf32>, vector<8x8xf32>, vector<8x8xf32> -> vector<8x8xf32>
    %cst_44 = arith.constant 0.353553385 : f32
    %80 = vector.broadcast %cst_44 : f32 to vector<8x8xf32>
    %81 = arith.mulf %79, %80 : vector<8x8xf32>
    %cst_45 = arith.constant -1.000000e+30 : f32
    %82 = vector.broadcast %cst_45 : f32 to vector<8x8xf32>
    %83 = arith.select %33, %81, %82 : vector<8x8xi1>, vector<8x8xf32>
    %cst_46 = arith.constant dense<0xFF800000> : vector<8xf32>
    %84 = vector.multi_reduction <maximumf>, %83, %cst_46 [1] : vector<8x8xf32> to vector<8xf32>
    %85 = vector.shape_cast %84 : vector<8xf32> to vector<8x1xf32>
    %86 = vector.broadcast %85 : vector<8x1xf32> to vector<8x8xf32>
    %87 = arith.subf %83, %86 : vector<8x8xf32>
    %88 = math.exp %87 : vector<8x8xf32>
    %cst_47 = arith.constant dense<0.000000e+00> : vector<8xf32>
    %89 = vector.multi_reduction <add>, %88, %cst_47 [1] : vector<8x8xf32> to vector<8xf32>
    %90 = vector.shape_cast %89 : vector<8xf32> to vector<8x1xf32>
    %91 = vector.broadcast %90 : vector<8x1xf32> to vector<8x8xf32>
    %92 = arith.divf %88, %91 : vector<8x8xf32>
    %c0_48 = arith.constant 0 : index
    %c2 = arith.constant 2 : index
    %c0_49 = arith.constant 0 : index
    %c0_50 = arith.constant 0 : index
    %93 = vector.load %arg14[%c0_48, %c2, %c0_49, %c0_50] : memref<1x4x8x8xf32, #tpu.memory_space<vmem>>, vector<1x1x8x8xf32>
    %94 = vector.shape_cast %93 : vector<1x1x8x8xf32> to vector<8x8xf32>
    %95 = vector.shape_cast %92 : vector<8x8xf32> to vector<1x1x8x8xf32>
    tpu.vector_store %arg14[%c0_48, %c2, %c0_49, %c0_50], %95 {strides = array<i32>} : memref<1x4x8x8xf32, #tpu.memory_space<vmem>>, vector<1x1x8x8xf32>,
    %cst_51 = arith.constant dense<0.000000e+00> : vector<8x8xf32>
    %96 = tpu.matmul %92, %78, %cst_51 {dimension_numbers = #tpu.dot_dimension_numbers<[1], [0], [0], [1], [0, 0, 1, 1], [], []>} : vector<8x8xf32>, vector<8x8xf32>, vector<8x8xf32> -> vector<8x8xf32>
    %97 = vector.extract_strided_slice %26 {offsets = [0, 24], sizes = [8, 8], strides = [1, 1]} : vector<8x32xf32> to vector<8x8xf32>
    %98 = vector.extract_strided_slice %30 {offsets = [0, 8], sizes = [8, 8], strides = [1, 1]} : vector<8x16xf32> to vector<8x8xf32>
    %99 = vector.extract_strided_slice %16 {offsets = [0, 8], sizes = [8, 8], strides = [1, 1]} : vector<8x16xf32> to vector<8x8xf32>
    %cst_52 = arith.constant dense<0.000000e+00> : vector<8x8xf32>
    %100 = tpu.matmul %97, %98, %cst_52 {dimension_numbers = #tpu.dot_dimension_numbers<[1], [1], [0], [0], [0, 0, 1, 0], [], []>} : vector<8x8xf32>, vector<8x8xf32>, vector<8x8xf32> -> vector<8x8xf32>
    %cst_53 = arith.constant 0.353553385 : f32
    %101 = vector.broadcast %cst_53 : f32 to vector<8x8xf32>
    %102 = arith.mulf %100, %101 : vector<8x8xf32>
    %cst_54 = arith.constant -1.000000e+30 : f32
    %103 = vector.broadcast %cst_54 : f32 to vector<8x8xf32>
    %104 = arith.select %33, %102, %103 : vector<8x8xi1>, vector<8x8xf32>
    %cst_55 = arith.constant dense<0xFF800000> : vector<8xf32>
    %105 = vector.multi_reduction <maximumf>, %104, %cst_55 [1] : vector<8x8xf32> to vector<8xf32>
    %106 = vector.shape_cast %105 : vector<8xf32> to vector<8x1xf32>
    %107 = vector.broadcast %106 : vector<8x1xf32> to vector<8x8xf32>
    %108 = arith.subf %104, %107 : vector<8x8xf32>
    %109 = math.exp %108 : vector<8x8xf32>
    %cst_56 = arith.constant dense<0.000000e+00> : vector<8xf32>
    %110 = vector.multi_reduction <add>, %109, %cst_56 [1] : vector<8x8xf32> to vector<8xf32>
    %111 = vector.shape_cast %110 : vector<8xf32> to vector<8x1xf32>
    %112 = vector.broadcast %111 : vector<8x1xf32> to vector<8x8xf32>
    %113 = arith.divf %109, %112 : vector<8x8xf32>
    %c0_57 = arith.constant 0 : index
    %c3 = arith.constant 3 : index
    %c0_58 = arith.constant 0 : index
    %c0_59 = arith.constant 0 : index
    %114 = vector.load %arg14[%c0_57, %c3, %c0_58, %c0_59] : memref<1x4x8x8xf32, #tpu.memory_space<vmem>>, vector<1x1x8x8xf32>
    %115 = vector.shape_cast %114 : vector<1x1x8x8xf32> to vector<8x8xf32>
    %116 = vector.shape_cast %113 : vector<8x8xf32> to vector<1x1x8x8xf32>
    tpu.vector_store %arg14[%c0_57, %c3, %c0_58, %c0_59], %116 {strides = array<i32>} : memref<1x4x8x8xf32, #tpu.memory_space<vmem>>, vector<1x1x8x8xf32>,
    %cst_60 = arith.constant dense<0.000000e+00> : vector<8x8xf32>
    %117 = tpu.matmul %113, %99, %cst_60 {dimension_numbers = #tpu.dot_dimension_numbers<[1], [0], [0], [1], [0, 0, 1, 1], [], []>} : vector<8x8xf32>, vector<8x8xf32>, vector<8x8xf32> -> vector<8x8xf32>
    %118 = tpu.concatenate %54, %75, %96, %117 in 1 : vector<8x8xf32>, vector<8x8xf32>, vector<8x8xf32>, vector<8x8xf32> -> vector<8x32xf32>
    %c0_61 = arith.constant 0 : index
    %c0_62 = arith.constant 0 : index
    %119 = vector.load %arg9[%c0_61, %c0_62] : memref<32x32xf32, #tpu.memory_space<vmem>>, vector<32x32xf32>
    %cst_63 = arith.constant dense<0.000000e+00> : vector<8x32xf32>
    %120 = tpu.matmul %118, %119, %cst_63 {dimension_numbers = #tpu.dot_dimension_numbers<[1], [1], [0], [0], [0, 0, 1, 0], [], []>} : vector<8x32xf32>, vector<32x32xf32>, vector<8x32xf32> -> vector<8x32xf32>
    %c0_64 = arith.constant 0 : index
    %c0_65 = arith.constant 0 : index
    %c0_66 = arith.constant 0 : index
    %121 = vector.load %arg2[%c0_64, %c0_65, %c0_66] : memref<1x8x32xf32, #tpu.memory_space<vmem>>, vector<1x8x32xf32>
    %122 = vector.shape_cast %121 : vector<1x8x32xf32> to vector<8x32xf32>
    %123 = arith.addf %120, %122 : vector<8x32xf32>
    %c0_67 = arith.constant 0 : index
    %c0_68 = arith.constant 0 : index
    %c0_69 = arith.constant 0 : index
    %124 = vector.load %arg13[%c0_67, %c0_68, %c0_69] : memref<1x8x32xf32, #tpu.memory_space<vmem>>, vector<1x8x32xf32>
    %125 = vector.shape_cast %124 : vector<1x8x32xf32> to vector<8x32xf32>
    %126 = vector.shape_cast %123 : vector<8x32xf32> to vector<1x8x32xf32>
    tpu.vector_store %arg13[%c0_67, %c0_68, %c0_69], %126 {strides = array<i32>} : memref<1x8x32xf32, #tpu.memory_space<vmem>>, vector<1x8x32xf32>,
    %127 = vector.extract_strided_slice %30 {offsets = [0, 0], sizes = [8, 8], strides = [1, 1]} : vector<8x16xf32> to vector<8x8xf32>
    %c0_70 = arith.constant 0 : index
    %c0_71 = arith.constant 0 : index
    %c0_72 = arith.constant 0 : index
    %c0_73 = arith.constant 0 : index
    %128 = vector.load %arg15[%c0_70, %c0_71, %c0_72, %c0_73] : memref<1x2x8x8xf32, #tpu.memory_space<vmem>>, vector<1x1x8x8xf32>
    %129 = vector.shape_cast %128 : vector<1x1x8x8xf32> to vector<8x8xf32>
    %130 = vector.shape_cast %127 : vector<8x8xf32> to vector<1x1x8x8xf32>
    tpu.vector_store %arg15[%c0_70, %c0_71, %c0_72, %c0_73], %130 {strides = array<i32>} : memref<1x2x8x8xf32, #tpu.memory_space<vmem>>, vector<1x1x8x8xf32>,
    %131 = vector.extract_strided_slice %16 {offsets = [0, 0], sizes = [8, 8], strides = [1, 1]} : vector<8x16xf32> to vector<8x8xf32>
    %c0_74 = arith.constant 0 : index
    %c0_75 = arith.constant 0 : index
    %c0_76 = arith.constant 0 : index
    %c0_77 = arith.constant 0 : index
    %132 = vector.load %arg16[%c0_74, %c0_75, %c0_76, %c0_77] : memref<1x2x8x8xf32, #tpu.memory_space<vmem>>, vector<1x1x8x8xf32>
    %133 = vector.shape_cast %132 : vector<1x1x8x8xf32> to vector<8x8xf32>
    %134 = vector.shape_cast %131 : vector<8x8xf32> to vector<1x1x8x8xf32>
    tpu.vector_store %arg16[%c0_74, %c0_75, %c0_76, %c0_77], %134 {strides = array<i32>} : memref<1x2x8x8xf32, #tpu.memory_space<vmem>>, vector<1x1x8x8xf32>,
    %135 = vector.extract_strided_slice %30 {offsets = [0, 8], sizes = [8, 8], strides = [1, 1]} : vector<8x16xf32> to vector<8x8xf32>
    %c0_78 = arith.constant 0 : index
    %c1_79 = arith.constant 1 : index
    %c0_80 = arith.constant 0 : index
    %c0_81 = arith.constant 0 : index
    %136 = vector.load %arg15[%c0_78, %c1_79, %c0_80, %c0_81] : memref<1x2x8x8xf32, #tpu.memory_space<vmem>>, vector<1x1x8x8xf32>
    %137 = vector.shape_cast %136 : vector<1x1x8x8xf32> to vector<8x8xf32>
    %138 = vector.shape_cast %135 : vector<8x8xf32> to vector<1x1x8x8xf32>
    tpu.vector_store %arg15[%c0_78, %c1_79, %c0_80, %c0_81], %138 {strides = array<i32>} : memref<1x2x8x8xf32, #tpu.memory_space<vmem>>, vector<1x1x8x8xf32>,
    %139 = vector.extract_strided_slice %16 {offsets = [0, 8], sizes = [8, 8], strides = [1, 1]} : vector<8x16xf32> to vector<8x8xf32>
    %c0_82 = arith.constant 0 : index
    %c1_83 = arith.constant 1 : index
    %c0_84 = arith.constant 0 : index
    %c0_85 = arith.constant 0 : index
    %140 = vector.load %arg16[%c0_82, %c1_83, %c0_84, %c0_85] : memref<1x2x8x8xf32, #tpu.memory_space<vmem>>, vector<1x1x8x8xf32>
    %141 = vector.shape_cast %140 : vector<1x1x8x8xf32> to vector<8x8xf32>
    %142 = vector.shape_cast %139 : vector<8x8xf32> to vector<1x1x8x8xf32>
    tpu.vector_store %arg16[%c0_82, %c1_83, %c0_84, %c0_85], %142 {strides = array<i32>} : memref<1x2x8x8xf32, #tpu.memory_space<vmem>>, vector<1x1x8x8xf32>,
    return
  }
  func.func @transform_0(%arg0: i32) -> (i32, i32, i32) {
    %c0_i32 = arith.constant 0 : i32
    %c0_i32_0 = arith.constant 0 : i32
    %c0_i32_1 = arith.constant 0 : i32
    return %arg0, %c0_i32, %c0_i32_0 : i32, i32, i32
  }
  func.func @transform_1(%arg0: i32) -> (i32, i32, i32) {
    %c0_i32 = arith.constant 0 : i32
    %c0_i32_0 = arith.constant 0 : i32
    %c0_i32_1 = arith.constant 0 : i32
    return %arg0, %c0_i32, %c0_i32_0 : i32, i32, i32
  }
  func.func @transform_2(%arg0: i32) -> (i32, i32) {
    %c0_i32 = arith.constant 0 : i32
    %c0_i32_0 = arith.constant 0 : i32
    %c0_i32_1 = arith.constant 0 : i32
    return %c0_i32, %c0_i32_0 : i32, i32
  }
  func.func @transform_3(%arg0: i32) -> (i32, i32) {
    %c0_i32 = arith.constant 0 : i32
    %c0_i32_0 = arith.constant 0 : i32
    %c0_i32_1 = arith.constant 0 : i32
    return %c0_i32, %c0_i32_0 : i32, i32
  }
  func.func @transform_4(%arg0: i32) -> (i32, i32) {
    %c0_i32 = arith.constant 0 : i32
    %c0_i32_0 = arith.constant 0 : i32
    %c0_i32_1 = arith.constant 0 : i32
    return %c0_i32, %c0_i32_0 : i32, i32
  }
  func.func @transform_5(%arg0: i32) -> (i32, i32) {
    %c0_i32 = arith.constant 0 : i32
    %c0_i32_0 = arith.constant 0 : i32
    %c0_i32_1 = arith.constant 0 : i32
    return %c0_i32, %c0_i32_0 : i32, i32
  }
  func.func @transform_6(%arg0: i32) -> (i32, i32) {
    %c0_i32 = arith.constant 0 : i32
    %c0_i32_0 = arith.constant 0 : i32
    %c0_i32_1 = arith.constant 0 : i32
    return %c0_i32, %c0_i32_0 : i32, i32
  }
  func.func @transform_7(%arg0: i32) -> (i32, i32) {
    %c0_i32 = arith.constant 0 : i32
    %c0_i32_0 = arith.constant 0 : i32
    %c0_i32_1 = arith.constant 0 : i32
    return %c0_i32, %c0_i32_0 : i32, i32
  }
  func.func @transform_8(%arg0: i32) -> (i32, i32) {
    %c0_i32 = arith.constant 0 : i32
    %c0_i32_0 = arith.constant 0 : i32
    %c0_i32_1 = arith.constant 0 : i32
    return %c0_i32, %c0_i32_0 : i32, i32
  }
  func.func @transform_9(%arg0: i32) -> (i32, i32) {
    %c0_i32 = arith.constant 0 : i32
    %c0_i32_0 = arith.constant 0 : i32
    %c0_i32_1 = arith.constant 0 : i32
    return %c0_i32, %c0_i32_0 : i32, i32
  }
  func.func @transform_10(%arg0: i32) -> (i32, i32) {
    %c0_i32 = arith.constant 0 : i32
    %c0_i32_0 = arith.constant 0 : i32
    %c0_i32_1 = arith.constant 0 : i32
    return %c0_i32, %c0_i32_0 : i32, i32
  }
  func.func @transform_11(%arg0: i32) -> (i32, i32) {
    %c0_i32 = arith.constant 0 : i32
    %c0_i32_0 = arith.constant 0 : i32
    %c0_i32_1 = arith.constant 0 : i32
    return %c0_i32, %c0_i32_0 : i32, i32
  }
  func.func @transform_12(%arg0: i32) -> (i32, i32, i32) {
    %c0_i32 = arith.constant 0 : i32
    %c0_i32_0 = arith.constant 0 : i32
    %c0_i32_1 = arith.constant 0 : i32
    return %arg0, %c0_i32, %c0_i32_0 : i32, i32, i32
  }
  func.func @transform_13(%arg0: i32) -> (i32, i32, i32, i32) {
    %c0_i32 = arith.constant 0 : i32
    %c0_i32_0 = arith.constant 0 : i32
    %c0_i32_1 = arith.constant 0 : i32
    %c0_i32_2 = arith.constant 0 : i32
    return %arg0, %c0_i32, %c0_i32_0, %c0_i32_1 : i32, i32, i32, i32
  }
  func.func @transform_14(%arg0: i32) -> (i32, i32, i32, i32) {
    %c0_i32 = arith.constant 0 : i32
    %c0_i32_0 = arith.constant 0 : i32
    %c0_i32_1 = arith.constant 0 : i32
    %c0_i32_2 = arith.constant 0 : i32
    return %arg0, %c0_i32, %c0_i32_0, %c0_i32_1 : i32, i32, i32, i32
  }
  func.func @transform_15(%arg0: i32) -> (i32, i32, i32, i32) {
    %c0_i32 = arith.constant 0 : i32
    %c0_i32_0 = arith.constant 0 : i32
    %c0_i32_1 = arith.constant 0 : i32
    %c0_i32_2 = arith.constant 0 : i32
    return %arg0, %c0_i32, %c0_i32_0, %c0_i32_1 : i32, i32, i32, i32
  }
}

</mosaic_0001>

<llo_original>
// kernel: tile.19
$region0: #{tile.19}
  %s0 = inlined_call_operand.vmem [shape: f32[8,4,8], index: 0, kind: input, shape index: {}]
  %s1 = inlined_call_operand.vmem [shape: f32[8,32], index: 1, kind: output, shape index: {}]
  $region1: #{tile.19} parent=0
    #allocation0 [shape = 'u8[32768]{0}', space=vmem, size = 0x8000, scoped, tag = 'scoped mem for input reshape']
    %s3 = sshllo.u32 0, 4
    %s4 = smul.addr 4, 7
    %s5 = scalar_lea.vmem %s0, %s4
    %v6 = vld [vmem:[%s5] sm:%s3]
    %s7 = scalar_lea.vmem [#allocation0], 56
    %8 = vst [vmem:[%s7] sm:%s3] %v6
    %s9 = smul.addr 4, 6
    %s10 = scalar_lea.vmem %s0, %s9
    %v11 = vld [vmem:[%s10] sm:%s3]
    %s12 = scalar_lea.vmem [#allocation0], 48
    %13 = vst [vmem:[%s12] sm:%s3] %v11
    %s14 = smul.addr 4, 5
    %s15 = scalar_lea.vmem %s0, %s14
    %v16 = vld [vmem:[%s15] sm:%s3]
    %s17 = scalar_lea.vmem [#allocation0], 40
    %18 = vst [vmem:[%s17] sm:%s3] %v16
    %s19 = smul.addr 4, 4
    %s20 = scalar_lea.vmem %s0, %s19
    %v21 = vld [vmem:[%s20] sm:%s3]
    %s22 = scalar_lea.vmem [#allocation0], 32
    %23 = vst [vmem:[%s22] sm:%s3] %v21
    %s24 = smul.addr 4, 3
    %s25 = scalar_lea.vmem %s0, %s24
    %v26 = vld [vmem:[%s25] sm:%s3]
    %s27 = scalar_lea.vmem [#allocation0], 24
    %28 = vst [vmem:[%s27] sm:%s3] %v26
    %s29 = smul.addr 4, 2
    %s30 = scalar_lea.vmem %s0, %s29
    %v31 = vld [vmem:[%s30] sm:%s3]
    %s32 = scalar_lea.vmem [#allocation0], 16
    %33 = vst [vmem:[%s32] sm:%s3] %v31
    %s34 = scalar_lea.vmem %s0, 4
    %v35 = vld [vmem:[%s34] sm:%s3]
    %s36 = scalar_lea.vmem [#allocation0], 8
    %37 = vst [vmem:[%s36] sm:%s3] %v35
    %v38 = vld [vmem:[%s0] sm:%s3]
    %39 = vst [vmem:[#allocation0] sm:%s3] %v38
    %v40 = vld [vmem:[#allocation0] ss:$8 sm:$0xf]
    %v41 = vld [vmem:[#allocation0] ss:$8 sm:$0xf0]
    %vm42 = vcmask 1047556
    %v43 = vsel %vm42, %v41, %v40
    %vm44 = vcmask 64512
    %45 = vst.msk [vmem:[%s1] sm:$0xff] %vm44, %v43
    %s46 = scalar_lea.vmem [#allocation0], 3
    %v47 = vld [vmem:[%s46] ss:$8 sm:$0xf]
    %s48 = scalar_lea.vmem [#allocation0], 3
    %v49 = vld [vmem:[%s48] ss:$8 sm:$0xf0]
    %vm50 = vcmask 1047556
    %v51 = vsel %vm50, %v49, %v47
    %52 = vrot.lane.b32.xlu0 %v51, 24
    %v53 = vpop.permute.xlu0 %52
    %vm54 = vcmask 261312
    %55 = vst.msk [vmem:[%s1] sm:$0xff] %vm54, %v53
    %s56 = scalar_lea.vmem [#allocation0], 2
    %v57 = vld [vmem:[%s56] ss:$8 sm:$0xf]
    %s58 = scalar_lea.vmem [#allocation0], 2
    %v59 = vld [vmem:[%s58] ss:$8 sm:$0xf0]
    %vm60 = vcmask 1047556
    %v61 = vsel %vm60, %v59, %v57
    %62 = vrot.lane.b32.xlu0 %v61, 16
    %v63 = vpop.permute.xlu0 %62
    %vm64 = vcmask 195712
    %65 = vst.msk [vmem:[%s1] sm:$0xff] %vm64, %v63
    %s66 = scalar_lea.vmem [#allocation0], 1
    %v67 = vld [vmem:[%s66] ss:$8 sm:$0xf]
    %s68 = scalar_lea.vmem [#allocation0], 1
    %v69 = vld [vmem:[%s68] ss:$8 sm:$0xf0]
    %vm70 = vcmask 1047556
    %v71 = vsel %vm70, %v69, %v67
    %72 = vrot.lane.b32.xlu0 %v71, 8
    %v73 = vpop.permute.xlu0 %72
    %vm74 = vcmask 130112
    %75 = vst.msk [vmem:[%s1] sm:$0xff] %vm74, %v73

// kernel: _qwen2_attn_forward.1
$region0: #{_qwen2_attn_forward.1}
  #allocation0 [shape = 'u32[]', space=smem, size = 0x4, offset = 0x4, fixed_abs, tag = 'smem constant byte address 0x4 - core index']
  #allocation1 [shape = 'u32[144,128]{1,0:T(1,128)}', space=vmem, size = 0x12000, scoped, tag = 'internal scratch']
  %s0 = inlined_call_operand.vmem [shape: f32[2,8,32], index: 0, kind: input, shape index: {}]
  %s1 = inlined_call_operand.vmem [shape: f32[2,8,32], index: 1, kind: input, shape index: {}]
  %s2 = inlined_call_operand.vmem [shape: f32[32,32], index: 2, kind: input, shape index: {}]
  %s3 = inlined_call_operand.vmem [shape: f32[1,32], index: 3, kind: input, shape index: {}]
  %s4 = inlined_call_operand.vmem [shape: f32[16,32], index: 4, kind: input, shape index: {}]
  %s5 = inlined_call_operand.vmem [shape: f32[1,16], index: 5, kind: input, shape index: {}]
  %s6 = inlined_call_operand.vmem [shape: f32[16,32], index: 6, kind: input, shape index: {}]
  %s7 = inlined_call_operand.vmem [shape: f32[1,16], index: 7, kind: input, shape index: {}]
  %s8 = inlined_call_operand.vmem [shape: f32[32,32], index: 8, kind: input, shape index: {}]
  %s9 = inlined_call_operand.vmem [shape: f32[8,32], index: 9, kind: input, shape index: {}]
  %s10 = inlined_call_operand.vmem [shape: f32[8,32], index: 10, kind: input, shape index: {}]
  %s11 = inlined_call_operand.vmem [shape: f32[32,32], index: 11, kind: input, shape index: {}]
  %s12 = inlined_call_operand.hbm [shape: f32[2,8,32], index: 12, kind: output, shape index: {0}]
  %s13 = inlined_call_operand.hbm [shape: f32[2,4,8,8], index: 13, kind: output, shape index: {1}]
  %s14 = inlined_call_operand.hbm [shape: f32[2,2,8,8], index: 14, kind: output, shape index: {2}]
  %s15 = inlined_call_operand.hbm [shape: f32[2,2,8,8], index: 15, kind: output, shape index: {3}]
  %16 = xla_tuple %s12, %s13, %s14, %s15
  %s17 = sld [smem:[#allocation0]]
  $region105: #{_qwen2_attn_forward.1} parent=0
    _
  %s19 = ssub.s32 1, %s17
  %s20 = scalar_select 0, %s19, %s17
  $region1: #{_qwen2_attn_forward.1} parent=0
    #allocation2 [shape = 'u8[8192]{0}', space=vmem, size = 0x2000, scoped, tag = 'output window, operand 0']
    #allocation3 [shape = 's32[2]{0}', space=sflag, size = 0x8, scoped, tag = 'scoped memory for _qwen2_attn_forward.1']
    #allocation4 [shape = 'u8[32768]{0}', space=vmem, size = 0x8000, scoped, tag = 'output window, operand 1']
    #allocation5 [shape = 's32[2]{0}', space=sflag, size = 0x8, scoped, tag = 'scoped memory for _qwen2_attn_forward.1']
    #allocation6 [shape = 'u8[16384]{0}', space=vmem, size = 0x4000, scoped, tag = 'output window, operand 2']
    #allocation7 [shape = 'u8[16384]{0}', space=vmem, size = 0x4000, scoped, tag = 'output window, operand 3']
    #allocation8 [shape = 's32[2]{0}', space=sflag, size = 0x8, scoped, tag = 'scoped memory for _qwen2_attn_forward.1']
    %21 = vsyncpa [#allocation3], 0
    %s22 = scalar_lea.sflag [#allocation3], 1
    %23 = vsyncpa %s22, 0
    %24 = vsyncpa [#allocation5], 0
    %s25 = scalar_lea.sflag [#allocation5], 1
    %26 = vsyncpa %s25, 0
    %27 = vsyncpa [#allocation8], 0
    %s28 = scalar_lea.sflag [#allocation8], 1
    %29 = vsyncpa %s28, 0
    loop: start=0, step=1, limit=4
    $region2: #{_qwen2_attn_forward.1} parent=1 // loop_pre_header
      _
    $region3: #{_qwen2_attn_forward.1} parent=1 // loop_header
      %s31 = sphi 0, %s35
      %p32 = scmp.ge.s32.totalorder %s31, 4
      %s41 = sphi 0, %s43
      %s44 = sphi 0, %s41
      %s45 = sphi 0, %s44
      %s61 = sphi 0, %s45
      %s67 = sphi 0, %s69
      %s70 = sphi 0, %s67
      %s71 = sphi 0, %s70
      %s87 = sphi 0, %s71
      %s91 = sphi 0, %s91
      %s93 = sphi 0, %s91
      %s94 = sphi 0, %s93
      %s108 = sphi 0, %s94
      %s112 = sphi 0, %s112
      %s114 = sphi 0, %s112
      %s115 = sphi 0, %s114
      %s129 = sphi 0, %s115
      %s133 = sphi 0, %s133
      %s135 = sphi 0, %s133
      %s136 = sphi 0, %s135
      %s150 = sphi 0, %s136
      %s154 = sphi 0, %s154
      %s156 = sphi 0, %s154
      %s157 = sphi 0, %s156
      %s171 = sphi 0, %s157
      %s175 = sphi 0, %s175
      %s177 = sphi 0, %s175
      %s178 = sphi 0, %s177
      %s192 = sphi 0, %s178
      %s196 = sphi 0, %s196
      %s198 = sphi 0, %s196
      %s199 = sphi 0, %s198
      %s213 = sphi 0, %s199
      %s217 = sphi 0, %s217
      %s219 = sphi 0, %s217
      %s220 = sphi 0, %s219
      %s234 = sphi 0, %s220
      %s238 = sphi 0, %s238
      %s240 = sphi 0, %s238
      %s241 = sphi 0, %s240
      %s255 = sphi 0, %s241
      %s259 = sphi 0, %s259
      %s261 = sphi 0, %s259
      %s262 = sphi 0, %s261
      %s276 = sphi 0, %s262
      %s280 = sphi 0, %s280
      %s282 = sphi 0, %s280
      %s283 = sphi 0, %s282
      %s297 = sphi 0, %s283
      %s303 = sphi 0, %s305
      %s306 = sphi 0, %s303
      %s307 = sphi 0, %s306
      %s323 = sphi 0, %s307
      %s329 = sphi 0, %s331
      %s332 = sphi 0, %s329
      %s333 = sphi 0, %s332
      %s349 = sphi 0, %s333
      %s355 = sphi 0, %s357
      %s358 = sphi 0, %s355
      %s359 = sphi 0, %s358
      %s375 = sphi 0, %s359
      %s381 = sphi 0, %s383
      %s384 = sphi 0, %s381
      %s385 = sphi 0, %s384
      %s401 = sphi 0, %s385
    $region4: #{_qwen2_attn_forward.1} parent=1 // loop_header_branch
      %34 = sbr.rel (%p32) target = $region8
    $region5: #{_qwen2_attn_forward.1} parent=1 // loop_body
      %s36 = ssub.s32 %s31, 1
      %s37 = ssub.s32 %s31, 2
      %s38 = sadd.s32 %s31, 1
      %s39 = ssub.s32 %s31, %s38
      %p40 = scmp.eq.s32.totalorder %s39, 0
      %s42 = sadd.s32 %s41, 1
      %s43 = scalar_select %p40, %s41, %s42
      %p46 = pneg %p40
      %p47 = scmp.eq.s32.totalorder %s31, 1
      %p48 = por %p46, %p47
      %p49 = scmp.ne.s32.totalorder %s41, %s44
      %p50 = scmp.eq.s32.totalorder %s31, 0
      %p51 = por %p49, %p50
      %p52 = scmp.ne.s32.totalorder %s41, %s44
      %p53 = scmp.eq.s32.totalorder %s36, 1
      %p54 = por %p52, %p53
      %p55 = scmp.ne.s32.totalorder %s44, %s45
      %p56 = scmp.eq.s32.totalorder %s36, 0
      %p57 = por %p55, %p56
      %p58 = scmp.ne.s32.totalorder %s44, %s45
      %p59 = scmp.eq.s32.totalorder %s37, 1
      %p60 = por %p58, %p59
      %p62 = scmp.ne.s32.totalorder %s45, %s61
      %p63 = scmp.eq.s32.totalorder %s37, 0
      %p64 = por %p62, %p63
      %s65 = ssub.s32 %s31, %s38
      %p66 = scmp.eq.s32.totalorder %s65, 0
      %s68 = sadd.s32 %s67, 1
      %s69 = scalar_select %p66, %s67, %s68
      %p72 = pneg %p66
      %p73 = scmp.eq.s32.totalorder %s31, 1
      %p74 = por %p72, %p73
      %p75 = scmp.ne.s32.totalorder %s67, %s70
      %p76 = scmp.eq.s32.totalorder %s31, 0
      %p77 = por %p75, %p76
      %p78 = scmp.ne.s32.totalorder %s67, %s70
      %p79 = scmp.eq.s32.totalorder %s36, 1
      %p80 = por %p78, %p79
      %p81 = scmp.ne.s32.totalorder %s70, %s71
      %p82 = scmp.eq.s32.totalorder %s36, 0
      %p83 = por %p81, %p82
      %p84 = scmp.ne.s32.totalorder %s70, %s71
      %p85 = scmp.eq.s32.totalorder %s37, 1
      %p86 = por %p84, %p85
      %p88 = scmp.ne.s32.totalorder %s71, %s87
      %p89 = scmp.eq.s32.totalorder %s37, 0
      %p90 = por %p88, %p89
      %s92 = sadd.s32 %s91, 1
      %p95 = scmp.eq.s32.totalorder %s31, 1
      %p96 = scmp.ne.s32.totalorder %s91, %s93
      %p97 = scmp.eq.s32.totalorder %s31, 0
      %p98 = por %p96, %p97
      %p99 = scmp.ne.s32.totalorder %s91, %s93
      %p100 = scmp.eq.s32.totalorder %s36, 1
      %p101 = por %p99, %p100
      %p102 = scmp.ne.s32.totalorder %s93, %s94
      %p103 = scmp.eq.s32.totalorder %s36, 0
      %p104 = por %p102, %p103
      %p105 = scmp.ne.s32.totalorder %s93, %s94
      %p106 = scmp.eq.s32.totalorder %s37, 1
      %p107 = por %p105, %p106
      %p109 = scmp.ne.s32.totalorder %s94, %s108
      %p110 = scmp.eq.s32.totalorder %s37, 0
      %p111 = por %p109, %p110
      %s113 = sadd.s32 %s112, 1
      %p116 = scmp.eq.s32.totalorder %s31, 1
      %p117 = scmp.ne.s32.totalorder %s112, %s114
      %p118 = scmp.eq.s32.totalorder %s31, 0
      %p119 = por %p117, %p118
      %p120 = scmp.ne.s32.totalorder %s112, %s114
      %p121 = scmp.eq.s32.totalorder %s36, 1
      %p122 = por %p120, %p121
      %p123 = scmp.ne.s32.totalorder %s114, %s115
      %p124 = scmp.eq.s32.totalorder %s36, 0
      %p125 = por %p123, %p124
      %p126 = scmp.ne.s32.totalorder %s114, %s115
      %p127 = scmp.eq.s32.totalorder %s37, 1
      %p128 = por %p126, %p127
      %p130 = scmp.ne.s32.totalorder %s115, %s129
      %p131 = scmp.eq.s32.totalorder %s37, 0
      %p132 = por %p130, %p131
      %s134 = sadd.s32 %s133, 1
      %p137 = scmp.eq.s32.totalorder %s31, 1
      %p138 = scmp.ne.s32.totalorder %s133, %s135
      %p139 = scmp.eq.s32.totalorder %s31, 0
      %p140 = por %p138, %p139
      %p141 = scmp.ne.s32.totalorder %s133, %s135
      %p142 = scmp.eq.s32.totalorder %s36, 1
      %p143 = por %p141, %p142
      %p144 = scmp.ne.s32.totalorder %s135, %s136
      %p145 = scmp.eq.s32.totalorder %s36, 0
      %p146 = por %p144, %p145
      %p147 = scmp.ne.s32.totalorder %s135, %s136
      %p148 = scmp.eq.s32.totalorder %s37, 1
      %p149 = por %p147, %p148
      %p151 = scmp.ne.s32.totalorder %s136, %s150
      %p152 = scmp.eq.s32.totalorder %s37, 0
      %p153 = por %p151, %p152
      %s155 = sadd.s32 %s154, 1
      %p158 = scmp.eq.s32.totalorder %s31, 1
      %p159 = scmp.ne.s32.totalorder %s154, %s156
      %p160 = scmp.eq.s32.totalorder %s31, 0
      %p161 = por %p159, %p160
      %p162 = scmp.ne.s32.totalorder %s154, %s156
      %p163 = scmp.eq.s32.totalorder %s36, 1
      %p164 = por %p162, %p163
      %p165 = scmp.ne.s32.totalorder %s156, %s157
      %p166 = scmp.eq.s32.totalorder %s36, 0
      %p167 = por %p165, %p166
      %p168 = scmp.ne.s32.totalorder %s156, %s157
      %p169 = scmp.eq.s32.totalorder %s37, 1
      %p170 = por %p168, %p169
      %p172 = scmp.ne.s32.totalorder %s157, %s171
      %p173 = scmp.eq.s32.totalorder %s37, 0
      %p174 = por %p172, %p173
      %s176 = sadd.s32 %s175, 1
      %p179 = scmp.eq.s32.totalorder %s31, 1
      %p180 = scmp.ne.s32.totalorder %s175, %s177
      %p181 = scmp.eq.s32.totalorder %s31, 0
      %p182 = por %p180, %p181
      %p183 = scmp.ne.s32.totalorder %s175, %s177
      %p184 = scmp.eq.s32.totalorder %s36, 1
      %p185 = por %p183, %p184
      %p186 = scmp.ne.s32.totalorder %s177, %s178
      %p187 = scmp.eq.s32.totalorder %s36, 0
      %p188 = por %p186, %p187
      %p189 = scmp.ne.s32.totalorder %s177, %s178
      %p190 = scmp.eq.s32.totalorder %s37, 1
      %p191 = por %p189, %p190
      %p193 = scmp.ne.s32.totalorder %s178, %s192
      %p194 = scmp.eq.s32.totalorder %s37, 0
      %p195 = por %p193, %p194
      %s197 = sadd.s32 %s196, 1
      %p200 = scmp.eq.s32.totalorder %s31, 1
      %p201 = scmp.ne.s32.totalorder %s196, %s198
      %p202 = scmp.eq.s32.totalorder %s31, 0
      %p203 = por %p201, %p202
      %p204 = scmp.ne.s32.totalorder %s196, %s198
      %p205 = scmp.eq.s32.totalorder %s36, 1
      %p206 = por %p204, %p205
      %p207 = scmp.ne.s32.totalorder %s198, %s199
      %p208 = scmp.eq.s32.totalorder %s36, 0
      %p209 = por %p207, %p208
      %p210 = scmp.ne.s32.totalorder %s198, %s199
      %p211 = scmp.eq.s32.totalorder %s37, 1
      %p212 = por %p210, %p211
      %p214 = scmp.ne.s32.totalorder %s199, %s213
      %p215 = scmp.eq.s32.totalorder %s37, 0
      %p216 = por %p214, %p215
      %s218 = sadd.s32 %s217, 1
      %p221 = scmp.eq.s32.totalorder %s31, 1
      %p222 = scmp.ne.s32.totalorder %s217, %s219
      %p223 = scmp.eq.s32.totalorder %s31, 0
      %p224 = por %p222, %p223
      %p225 = scmp.ne.s32.totalorder %s217, %s219
      %p226 = scmp.eq.s32.totalorder %s36, 1
      %p227 = por %p225, %p226
      %p228 = scmp.ne.s32.totalorder %s219, %s220
      %p229 = scmp.eq.s32.totalorder %s36, 0
      %p230 = por %p228, %p229
      %p231 = scmp.ne.s32.totalorder %s219, %s220
      %p232 = scmp.eq.s32.totalorder %s37, 1
      %p233 = por %p231, %p232
      %p235 = scmp.ne.s32.totalorder %s220, %s234
      %p236 = scmp.eq.s32.totalorder %s37, 0
      %p237 = por %p235, %p236
      %s239 = sadd.s32 %s238, 1
      %p242 = scmp.eq.s32.totalorder %s31, 1
      %p243 = scmp.ne.s32.totalorder %s238, %s240
      %p244 = scmp.eq.s32.totalorder %s31, 0
      %p245 = por %p243, %p244
      %p246 = scmp.ne.s32.totalorder %s238, %s240
      %p247 = scmp.eq.s32.totalorder %s36, 1
      %p248 = por %p246, %p247
      %p249 = scmp.ne.s32.totalorder %s240, %s241
      %p250 = scmp.eq.s32.totalorder %s36, 0
      %p251 = por %p249, %p250
      %p252 = scmp.ne.s32.totalorder %s240, %s241
      %p253 = scmp.eq.s32.totalorder %s37, 1
      %p254 = por %p252, %p253
      %p256 = scmp.ne.s32.totalorder %s241, %s255
      %p257 = scmp.eq.s32.totalorder %s37, 0
      %p258 = por %p256, %p257
      %s260 = sadd.s32 %s259, 1
      %p263 = scmp.eq.s32.totalorder %s31, 1
      %p264 = scmp.ne.s32.totalorder %s259, %s261
      %p265 = scmp.eq.s32.totalorder %s31, 0
      %p266 = por %p264, %p265
      %p267 = scmp.ne.s32.totalorder %s259, %s261
      %p268 = scmp.eq.s32.totalorder %s36, 1
      %p269 = por %p267, %p268
      %p270 = scmp.ne.s32.totalorder %s261, %s262
      %p271 = scmp.eq.s32.totalorder %s36, 0
      %p272 = por %p270, %p271
      %p273 = scmp.ne.s32.totalorder %s261, %s262
      %p274 = scmp.eq.s32.totalorder %s37, 1
      %p275 = por %p273, %p274
      %p277 = scmp.ne.s32.totalorder %s262, %s276
      %p278 = scmp.eq.s32.totalorder %s37, 0
      %p279 = por %p277, %p278
      %s281 = sadd.s32 %s280, 1
      %p284 = scmp.eq.s32.totalorder %s31, 1
      %p285 = scmp.ne.s32.totalorder %s280, %s282
      %p286 = scmp.eq.s32.totalorder %s31, 0
      %p287 = por %p285, %p286
      %p288 = scmp.ne.s32.totalorder %s280, %s282
      %p289 = scmp.eq.s32.totalorder %s36, 1
      %p290 = por %p288, %p289
      %p291 = scmp.ne.s32.totalorder %s282, %s283
      %p292 = scmp.eq.s32.totalorder %s36, 0
      %p293 = por %p291, %p292
      %p294 = scmp.ne.s32.totalorder %s282, %s283
      %p295 = scmp.eq.s32.totalorder %s37, 1
      %p296 = por %p294, %p295
      %p298 = scmp.ne.s32.totalorder %s283, %s297
      %p299 = scmp.eq.s32.totalorder %s37, 0
      %p300 = por %p298, %p299
      %s301 = ssub.s32 %s31, %s38
      %p302 = scmp.eq.s32.totalorder %s301, 0
      %s304 = sadd.s32 %s303, 1
      %s305 = scalar_select %p302, %s303, %s304
      %p308 = pneg %p302
      %p309 = scmp.eq.s32.totalorder %s31, 1
      %p310 = por %p308, %p309
      %p311 = scmp.ne.s32.totalorder %s303, %s306
      %p312 = scmp.eq.s32.totalorder %s31, 0
      %p313 = por %p311, %p312
      %p314 = scmp.ne.s32.totalorder %s303, %s306
      %p315 = scmp.eq.s32.totalorder %s36, 1
      %p316 = por %p314, %p315
      %p317 = scmp.ne.s32.totalorder %s306, %s307
      %p318 = scmp.eq.s32.totalorder %s36, 0
      %p319 = por %p317, %p318
      %p320 = scmp.ne.s32.totalorder %s306, %s307
      %p321 = scmp.eq.s32.totalorder %s37, 1
      %p322 = por %p320, %p321
      %p324 = scmp.ne.s32.totalorder %s307, %s323
      %p325 = scmp.eq.s32.totalorder %s37, 0
      %p326 = por %p324, %p325
      %s327 = ssub.s32 %s31, %s38
      %p328 = scmp.eq.s32.totalorder %s327, 0
      %s330 = sadd.s32 %s329, 1
      %s331 = scalar_select %p328, %s329, %s330
      %p334 = pneg %p328
      %p335 = scmp.eq.s32.totalorder %s31, 1
      %p336 = por %p334, %p335
      %p337 = scmp.ne.s32.totalorder %s329, %s332
      %p338 = scmp.eq.s32.totalorder %s31, 0
      %p339 = por %p337, %p338
      %p340 = scmp.ne.s32.totalorder %s329, %s332
      %p341 = scmp.eq.s32.totalorder %s36, 1
      %p342 = por %p340, %p341
      %p343 = scmp.ne.s32.totalorder %s332, %s333
      %p344 = scmp.eq.s32.totalorder %s36, 0
      %p345 = por %p343, %p344
      %p346 = scmp.ne.s32.totalorder %s332, %s333
      %p347 = scmp.eq.s32.totalorder %s37, 1
      %p348 = por %p346, %p347
      %p350 = scmp.ne.s32.totalorder %s333, %s349
      %p351 = scmp.eq.s32.totalorder %s37, 0
      %p352 = por %p350, %p351
      %s353 = ssub.s32 %s31, %s38
      %p354 = scmp.eq.s32.totalorder %s353, 0
      %s356 = sadd.s32 %s355, 1
      %s357 = scalar_select %p354, %s355, %s356
      %p360 = pneg %p354
      %p361 = scmp.eq.s32.totalorder %s31, 1
      %p362 = por %p360, %p361
      %p363 = scmp.ne.s32.totalorder %s355, %s358
      %p364 = scmp.eq.s32.totalorder %s31, 0
      %p365 = por %p363, %p364
      %p366 = scmp.ne.s32.totalorder %s355, %s358
      %p367 = scmp.eq.s32.totalorder %s36, 1
      %p368 = por %p366, %p367
      %p369 = scmp.ne.s32.totalorder %s358, %s359
      %p370 = scmp.eq.s32.totalorder %s36, 0
      %p371 = por %p369, %p370
      %p372 = scmp.ne.s32.totalorder %s358, %s359
      %p373 = scmp.eq.s32.totalorder %s37, 1
      %p374 = por %p372, %p373
      %p376 = scmp.ne.s32.totalorder %s359, %s375
      %p377 = scmp.eq.s32.totalorder %s37, 0
      %p378 = por %p376, %p377
      %s379 = ssub.s32 %s31, %s38
      %p380 = scmp.eq.s32.totalorder %s379, 0
      %s382 = sadd.s32 %s381, 1
      %s383 = scalar_select %p380, %s381, %s382
      %p386 = pneg %p380
      %p387 = scmp.eq.s32.totalorder %s31, 1
      %p388 = por %p386, %p387
      %p389 = scmp.ne.s32.totalorder %s381, %s384
      %p390 = scmp.eq.s32.totalorder %s31, 0
      %p391 = por %p389, %p390
      %p392 = scmp.ne.s32.totalorder %s381, %s384
      %p393 = scmp.eq.s32.totalorder %s36, 1
      %p394 = por %p392, %p393
      %p395 = scmp.ne.s32.totalorder %s384, %s385
      %p396 = scmp.eq.s32.totalorder %s36, 0
      %p397 = por %p395, %p396
      %p398 = scmp.ne.s32.totalorder %s384, %s385
      %p399 = scmp.eq.s32.totalorder %s37, 1
      %p400 = por %p398, %p399
      %p402 = scmp.ne.s32.totalorder %s385, %s401
      %p403 = scmp.eq.s32.totalorder %s37, 0
      %p404 = por %p402, %p403
      %p405 = scmp.le.s32.totalorder 1, %s31
      %p406 = scmp.lt.s32.totalorder %s31, 3
      %p407 = pnand %p405, %p406
      %p408 = pneg %p407
      // Predicated region
      $region9: #{_qwen2_attn_forward.1} parent=5 // pred_check
        _
      $region10: #{_qwen2_attn_forward.1} parent=5 // pred_check_branch
        %410 = sbr.rel (%p407) target = $region12
      $region11: #{_qwen2_attn_forward.1} parent=5 // pred_region
        %s411 = ssub.s32 %s31, 1
        // Predicated region
        $region13: #{_qwen2_attn_forward.1} parent=11 // pred_check
          %p412 = pneg %p104
        $region14: #{_qwen2_attn_forward.1} parent=11 // pred_check_branch
          %414 = sbr.rel (%p412) target = $region16
        $region15: #{_qwen2_attn_forward.1} parent=11 // pred_region
          _
        $region16: #{_qwen2_attn_forward.1} parent=11 // pred_fallthru
          _
        // Predicated region
        $region17: #{_qwen2_attn_forward.1} parent=11 // pred_check
          %p415 = pneg %p125
        $region18: #{_qwen2_attn_forward.1} parent=11 // pred_check_branch
          %417 = sbr.rel (%p415) target = $region20
        $region19: #{_qwen2_attn_forward.1} parent=11 // pred_region
          _
        $region20: #{_qwen2_attn_forward.1} parent=11 // pred_fallthru
          _
        // Predicated region
        $region21: #{_qwen2_attn_forward.1} parent=11 // pred_check
          %p418 = pneg %p146
        $region22: #{_qwen2_attn_forward.1} parent=11 // pred_check_branch
          %420 = sbr.rel (%p418) target = $region24
        $region23: #{_qwen2_attn_forward.1} parent=11 // pred_region
          _
        $region24: #{_qwen2_attn_forward.1} parent=11 // pred_fallthru
          _
        // Predicated region
        $region25: #{_qwen2_attn_forward.1} parent=11 // pred_check
          %p421 = pneg %p167
        $region26: #{_qwen2_attn_forward.1} parent=11 // pred_check_branch
          %423 = sbr.rel (%p421) target = $region28
        $region27: #{_qwen2_attn_forward.1} parent=11 // pred_region
          _
        $region28: #{_qwen2_attn_forward.1} parent=11 // pred_fallthru
          _
        // Predicated region
        $region29: #{_qwen2_attn_forward.1} parent=11 // pred_check
          %p424 = pneg %p188
        $region30: #{_qwen2_attn_forward.1} parent=11 // pred_check_branch
          %426 = sbr.rel (%p424) target = $region32
        $region31: #{_qwen2_attn_forward.1} parent=11 // pred_region
          _
        $region32: #{_qwen2_attn_forward.1} parent=11 // pred_fallthru
          _
        // Predicated region
        $region33: #{_qwen2_attn_forward.1} parent=11 // pred_check
          %p427 = pneg %p209
        $region34: #{_qwen2_attn_forward.1} parent=11 // pred_check_branch
          %429 = sbr.rel (%p427) target = $region36
        $region35: #{_qwen2_attn_forward.1} parent=11 // pred_region
          _
        $region36: #{_qwen2_attn_forward.1} parent=11 // pred_fallthru
          _
        // Predicated region
        $region37: #{_qwen2_attn_forward.1} parent=11 // pred_check
          %p430 = pneg %p230
        $region38: #{_qwen2_attn_forward.1} parent=11 // pred_check_branch
          %432 = sbr.rel (%p430) target = $region40
        $region39: #{_qwen2_attn_forward.1} parent=11 // pred_region
          _
        $region40: #{_qwen2_attn_forward.1} parent=11 // pred_fallthru
          _
        // Predicated region
        $region41: #{_qwen2_attn_forward.1} parent=11 // pred_check
          %p433 = pneg %p251
        $region42: #{_qwen2_attn_forward.1} parent=11 // pred_check_branch
          %435 = sbr.rel (%p433) target = $region44
        $region43: #{_qwen2_attn_forward.1} parent=11 // pred_region
          _
        $region44: #{_qwen2_attn_forward.1} parent=11 // pred_fallthru
          _
        // Predicated region
        $region45: #{_qwen2_attn_forward.1} parent=11 // pred_check
          %p436 = pneg %p272
        $region46: #{_qwen2_attn_forward.1} parent=11 // pred_check_branch
          %438 = sbr.rel (%p436) target = $region48
        $region47: #{_qwen2_attn_forward.1} parent=11 // pred_region
          _
        $region48: #{_qwen2_attn_forward.1} parent=11 // pred_fallthru
          _
        // Predicated region
        $region49: #{_qwen2_attn_forward.1} parent=11 // pred_check
          %p439 = pneg %p293
        $region50: #{_qwen2_attn_forward.1} parent=11 // pred_check_branch
          %441 = sbr.rel (%p439) target = $region52
        $region51: #{_qwen2_attn_forward.1} parent=11 // pred_region
          _
        $region52: #{_qwen2_attn_forward.1} parent=11 // pred_fallthru
          _
      $region12: #{_qwen2_attn_forward.1} parent=5 // pred_fallthru
        _
      %p442 = scmp.lt.s32.totalorder %s31, 2
      // Predicated region
      $region53: #{_qwen2_attn_forward.1} parent=5 // pred_check
        %p443 = pneg %p442
      $region54: #{_qwen2_attn_forward.1} parent=5 // pred_check_branch
        %445 = sbr.rel (%p443) target = $region56
      $region55: #{_qwen2_attn_forward.1} parent=5 // pred_region
        // Predicated region
        $region57: #{_qwen2_attn_forward.1} parent=55 // pred_check
          %p446 = pneg %p51
        $region58: #{_qwen2_attn_forward.1} parent=55 // pred_check_branch
          %448 = sbr.rel (%p446) target = $region60
        $region59: #{_qwen2_attn_forward.1} parent=55 // pred_region
          %p449 = scmp.lt.s32.totalorder %s31, 1
          %s450 = scalar_select %p449, %s31, 1
          %s451 = smul.addr %s450, 8
          %s452 = scalar_lea.vmem %s0, %s451
        $region60: #{_qwen2_attn_forward.1} parent=55 // pred_fallthru
          _
        // Predicated region
        $region61: #{_qwen2_attn_forward.1} parent=55 // pred_check
          %p453 = pneg %p77
        $region62: #{_qwen2_attn_forward.1} parent=55 // pred_check_branch
          %455 = sbr.rel (%p453) target = $region64
        $region63: #{_qwen2_attn_forward.1} parent=55 // pred_region
          %p456 = scmp.lt.s32.totalorder %s31, 1
          %s457 = scalar_select %p456, %s31, 1
          %s458 = smul.addr %s457, 8
          %s459 = scalar_lea.vmem %s1, %s458
        $region64: #{_qwen2_attn_forward.1} parent=55 // pred_fallthru
          _
      $region56: #{_qwen2_attn_forward.1} parent=5 // pred_fallthru
        _
      %p460 = scmp.le.s32.totalorder 1, %s31
      %p461 = scmp.lt.s32.totalorder %s31, 3
      %p462 = pnand %p460, %p461
      %p463 = pneg %p462
      // Predicated region
      $region65: #{_qwen2_attn_forward.1} parent=5 // pred_check
        _
      $region66: #{_qwen2_attn_forward.1} parent=5 // pred_check_branch
        %465 = sbr.rel (%p462) target = $region68
      $region67: #{_qwen2_attn_forward.1} parent=5 // pred_region
        %s466 = ssub.s32 %s31, 1
        %p467 = scmp.lt.s32.totalorder %s36, 1
        %s468 = scalar_select %p467, %s36, 1
        %s469 = smul.addr %s468, 8
        %s470 = scalar_lea.vmem %s0, %s469
        %p471 = pneg %p57
        %p472 = pneg %p54
        %p473 = scmp.lt.s32.totalorder %s36, 1
        %s474 = scalar_select %p473, %s36, 1
        %s475 = smul.addr %s474, 8
        %s476 = scalar_lea.vmem %s1, %s475
        %p477 = pneg %p83
        %p478 = pneg %p80
        %p479 = pneg %p104
        %p480 = pneg %p101
        %p481 = pneg %p125
        %p482 = pneg %p122
        %p483 = pneg %p146
        %p484 = pneg %p143
        %p485 = pneg %p167
        %p486 = pneg %p164
        %p487 = pneg %p188
        %p488 = pneg %p185
        %p489 = pneg %p209
        %p490 = pneg %p206
        %p491 = pneg %p230
        %p492 = pneg %p227
        %p493 = pneg %p251
        %p494 = pneg %p248
        %p495 = pneg %p272
        %p496 = pneg %p269
        %p497 = pneg %p293
        %p498 = pneg %p290
        %p499 = pneg %p319
        %p500 = pneg %p316
        %s501 = sand.u32 %s306, 1
        %s502 = scalar_lea.sflag [#allocation3], %s501
        %s503 = sand.u32 %s306, 1
        %s504 = smul.addr %s503, 8
        %s505 = scalar_lea.vmem [#allocation2], %s504
        %p506 = pneg %p345
        %p507 = pneg %p342
        %s508 = sand.u32 %s36, 1
        %s509 = scalar_lea.sflag [#allocation5], %s508
        %s510 = sand.u32 %s332, 1
        %s511 = smul.addr %s510, 32
        %s512 = scalar_lea.vmem [#allocation4], %s511
        %p513 = pneg %p371
        %p514 = pneg %p368
        %s515 = sand.u32 %s36, 1
        %s516 = scalar_lea.sflag [#allocation5], %s515
        %s517 = sand.u32 %s358, 1
        %s518 = smul.addr %s517, 16
        %s519 = scalar_lea.vmem [#allocation6], %s518
        %p520 = pneg %p397
        %p521 = pneg %p394
        %s522 = sand.u32 %s384, 1
        %s523 = scalar_lea.sflag [#allocation8], %s522
        %s524 = sand.u32 %s384, 1
        %s525 = smul.addr %s524, 16
        %s526 = scalar_lea.vmem [#allocation7], %s525
        %p527 = scmp.lt.s32.totalorder %s36, 1
        %s528 = scalar_select %p527, %s36, 1
        %s529 = smul.addr %s528, 8
        %s530 = scalar_lea.vmem %s0, %s529
        %p531 = scmp.lt.s32.totalorder %s36, 1
        %s532 = scalar_select %p531, %s36, 1
        %s533 = smul.addr %s532, 8
        %s534 = scalar_lea.vmem %s1, %s533
        %v535 = vld [vmem:[%s530] sm:$0xff]
        %v536 = vld [vmem:[%s2] sm:$0xff]
        %v537 = vld [vmem:[%s2 + $0x8] sm:$0xff]
        %v538 = vld [vmem:[%s2 + $0x10] sm:$0xff]
        %v539 = vld [vmem:[%s2 + $0x18] sm:$0xff]
        %v540 = vld [vmem:[%s3] sm:$0x1]
        %v542 = vlaneseq
        %v543 = vshrl.u32 %v542, 7
        %v544 = vsub.s32 0, %v543
        %v545 = vrot.slane %v540, %v544
        %vm547 = vcmask 261120
        %v549 = vsel %vm547, %v535, 0
        %v552 = vsel %vm547, %v536, 0
        %v555 = vsel %vm547, %v537, 0
        %v558 = vsel %vm547, %v538, 0
        %v561 = vsel %vm547, %v539, 0
        %563 = vmatprep.subr.mxu0 0.0
        %564 = vmatpush1.xpose.msra.mxu0 %v552
        %565 = vmatprep.subr.mxu0 0.0
        %566 = vmatpush1.xpose.msra.mxu0 %v555
        %567 = vmatprep.subr.mxu0 0.0
        %568 = vmatpush1.xpose.msra.mxu0 %v558
        %569 = vmatprep.subr.mxu0 0.0
        %570 = vmatpush1.xpose.msra.mxu0 %v561
        %571 = vmatprep.subr.mxu0 0.0
        %572 = vmatpush1.xpose.msra.mxu0 0.0
        %573 = vmatprep.subr.mxu0 0.0
        %574 = vmatpush1.xpose.msra.mxu0 0.0
        %575 = vmatprep.subr.mxu0 0.0
        %576 = vmatpush1.xpose.msra.mxu0 0.0
        %577 = vmatprep.subr.mxu0 0.0
        %578 = vmatpush1.xpose.msra.mxu0 0.0
        %579 = vmatprep.subr.mxu0 0.0
        %580 = vmatpush1.xpose.msra.mxu0 0.0
        %581 = vmatprep.subr.mxu0 0.0
        %582 = vmatpush1.xpose.msra.mxu0 0.0
        %583 = vmatprep.subr.mxu0 0.0
        %584 = vmatpush1.xpose.msra.mxu0 0.0
        %585 = vmatprep.subr.mxu0 0.0
        %586 = vmatpush1.xpose.msra.mxu0 0.0
        %587 = vmatprep.subr.mxu0 0.0
        %588 = vmatpush1.xpose.msra.mxu0 0.0
        %589 = vmatprep.subr.mxu0 0.0
        %590 = vmatpush1.xpose.msra.mxu0 0.0
        %591 = vmatprep.subr.mxu0 0.0
        %592 = vmatpush1.xpose.msra.mxu0 0.0
        %593 = vmatprep.subr.mxu0 0.0
        %594 = vmatpush1.xpose.msra.mxu0 0.0
        %595 = vmatprep.subr.mxu0 0.0
        %596 = vmatpush1.xpose.msra.mxu0 0.0
        %597 = vmatprep.subr.mxu0 0.0
        %598 = vmatpush1.xpose.msra.mxu0 0.0
        %599 = vmatprep.subr.mxu0 0.0
        %600 = vmatpush1.xpose.msra.mxu0 0.0
        %601 = vmatprep.subr.mxu0 0.0
        %602 = vmatpush1.xpose.msra.mxu0 0.0
        %603 = vmatprep.subr.mxu0 0.0
        %604 = vmatpush1.xpose.msra.mxu0 0.0
        %605 = vmatprep.subr.mxu0 0.0
        %606 = vmatpush1.xpose.msra.mxu0 0.0
        %607 = vmatprep.subr.mxu0 0.0
        %608 = vmatpush1.xpose.msra.mxu0 0.0
        %609 = vmatprep.subr.mxu0 0.0
        %610 = vmatpush1.xpose.msra.mxu0 0.0
        %611 = vmatprep.subr.mxu0 0.0
        %612 = vmatpush1.xpose.msra.mxu0 0.0
        %613 = vmatprep.subr.mxu0 0.0
        %614 = vmatpush1.xpose.msra.mxu0 0.0
        %615 = vmatprep.subr.mxu0 0.0
        %616 = vmatpush1.xpose.msra.mxu0 0.0
        %617 = vmatprep.subr.mxu0 0.0
        %618 = vmatpush1.xpose.msra.mxu0 0.0
        %619 = vmatprep.subr.mxu0 0.0
        %620 = vmatpush1.xpose.msra.mxu0 0.0
        %621 = vmatprep.subr.mxu0 0.0
        %622 = vmatpush1.xpose.msra.mxu0 0.0
        %623 = vmatprep.subr.mxu0 0.0
        %624 = vmatpush1.xpose.msra.mxu0 0.0
        %625 = vmatprep.subr.mxu0 0.0
        %626 = vmatpush1.xpose.msra.mxu0 0.0
        %627 = vmatprep.mubr.f32.mxu0 0.0
        %628 = vmatmul.mubr.f32.gmra.mrb[0].mxu0 %v549
        %v629 = vpop.f32.mrb[0].mxu0
        %v630 = vadd.f32 %v545, %v629
        %v631 = vpop.f32.mrb[0].mxu0
        %632 = vdwg.mxu0
        %v633 = vld [vmem:[%s4] sm:$0xff]
        %v634 = vld [vmem:[%s4 + $0x8] sm:$0xff]
        %v635 = vld [vmem:[%s5] sm:$0x1]
        %v637 = vlaneseq
        %v638 = vshrl.u32 %v637, 7
        %v639 = vsub.s32 0, %v638
        %v640 = vrot.slane %v635, %v639
        %v643 = vsel %vm547, %v633, 0
        %v646 = vsel %vm547, %v634, 0
        %648 = vmatprep.subr.mxu0 0.0
        %649 = vmatpush1.xpose.msra.mxu0 %v643
        %650 = vmatprep.subr.mxu0 0.0
        %651 = vmatpush1.xpose.msra.mxu0 %v646
        %652 = vmatprep.subr.mxu0 0.0
        %653 = vmatpush1.xpose.msra.mxu0 0.0
        %654 = vmatprep.subr.mxu0 0.0
        %655 = vmatpush1.xpose.msra.mxu0 0.0
        %656 = vmatprep.subr.mxu0 0.0
        %657 = vmatpush1.xpose.msra.mxu0 0.0
        %658 = vmatprep.subr.mxu0 0.0
        %659 = vmatpush1.xpose.msra.mxu0 0.0
        %660 = vmatprep.subr.mxu0 0.0
        %661 = vmatpush1.xpose.msra.mxu0 0.0
        %662 = vmatprep.subr.mxu0 0.0
        %663 = vmatpush1.xpose.msra.mxu0 0.0
        %664 = vmatprep.subr.mxu0 0.0
        %665 = vmatpush1.xpose.msra.mxu0 0.0
        %666 = vmatprep.subr.mxu0 0.0
        %667 = vmatpush1.xpose.msra.mxu0 0.0
        %668 = vmatprep.subr.mxu0 0.0
        %669 = vmatpush1.xpose.msra.mxu0 0.0
        %670 = vmatprep.subr.mxu0 0.0
        %671 = vmatpush1.xpose.msra.mxu0 0.0
        %672 = vmatprep.subr.mxu0 0.0
        %673 = vmatpush1.xpose.msra.mxu0 0.0
        %674 = vmatprep.subr.mxu0 0.0
        %675 = vmatpush1.xpose.msra.mxu0 0.0
        %676 = vmatprep.subr.mxu0 0.0
        %677 = vmatpush1.xpose.msra.mxu0 0.0
        %678 = vmatprep.subr.mxu0 0.0
        %679 = vmatpush1.xpose.msra.mxu0 0.0
        %680 = vmatprep.subr.mxu0 0.0
        %681 = vmatpush1.xpose.msra.mxu0 0.0
        %682 = vmatprep.subr.mxu0 0.0
        %683 = vmatpush1.xpose.msra.mxu0 0.0
        %684 = vmatprep.subr.mxu0 0.0
        %685 = vmatpush1.xpose.msra.mxu0 0.0
        %686 = vmatprep.subr.mxu0 0.0
        %687 = vmatpush1.xpose.msra.mxu0 0.0
        %688 = vmatprep.subr.mxu0 0.0
        %689 = vmatpush1.xpose.msra.mxu0 0.0
        %690 = vmatprep.subr.mxu0 0.0
        %691 = vmatpush1.xpose.msra.mxu0 0.0
        %692 = vmatprep.subr.mxu0 0.0
        %693 = vmatpush1.xpose.msra.mxu0 0.0
        %694 = vmatprep.subr.mxu0 0.0
        %695 = vmatpush1.xpose.msra.mxu0 0.0
        %696 = vmatprep.subr.mxu0 0.0
        %697 = vmatpush1.xpose.msra.mxu0 0.0
        %698 = vmatprep.subr.mxu0 0.0
        %699 = vmatpush1.xpose.msra.mxu0 0.0
        %700 = vmatprep.subr.mxu0 0.0
        %701 = vmatpush1.xpose.msra.mxu0 0.0
        %702 = vmatprep.subr.mxu0 0.0
        %703 = vmatpush1.xpose.msra.mxu0 0.0
        %704 = vmatprep.subr.mxu0 0.0
        %705 = vmatpush1.xpose.msra.mxu0 0.0
        %706 = vmatprep.subr.mxu0 0.0
        %707 = vmatpush1.xpose.msra.mxu0 0.0
        %708 = vmatprep.subr.mxu0 0.0
        %709 = vmatpush1.xpose.msra.mxu0 0.0
        %710 = vmatprep.subr.mxu0 0.0
        %711 = vmatpush1.xpose.msra.mxu0 0.0
        %712 = vmatprep.mubr.f32.mxu0 0.0
        %713 = vmatmul.mubr.f32.gmra.mrb[0].mxu0 %v549
        %v714 = vpop.f32.mrb[0].mxu0
        %v715 = vadd.f32 %v640, %v714
        %v716 = vpop.f32.mrb[0].mxu0
        %717 = vdwg.mxu0
        %v718 = vld [vmem:[%s6] sm:$0xff]
        %v719 = vld [vmem:[%s6 + $0x8] sm:$0xff]
        %v720 = vld [vmem:[%s7] sm:$0x1]
        %v722 = vlaneseq
        %v723 = vshrl.u32 %v722, 7
        %v724 = vsub.s32 0, %v723
        %v725 = vrot.slane %v720, %v724
        %v728 = vsel %vm547, %v718, 0
        %v731 = vsel %vm547, %v719, 0
        %733 = vmatprep.subr.mxu0 0.0
        %734 = vmatpush1.xpose.msra.mxu0 %v728
        %735 = vmatprep.subr.mxu0 0.0
        %736 = vmatpush1.xpose.msra.mxu0 %v731
        %737 = vmatprep.subr.mxu0 0.0
        %738 = vmatpush1.xpose.msra.mxu0 0.0
        %739 = vmatprep.subr.mxu0 0.0
        %740 = vmatpush1.xpose.msra.mxu0 0.0
        %741 = vmatprep.subr.mxu0 0.0
        %742 = vmatpush1.xpose.msra.mxu0 0.0
        %743 = vmatprep.subr.mxu0 0.0
        %744 = vmatpush1.xpose.msra.mxu0 0.0
        %745 = vmatprep.subr.mxu0 0.0
        %746 = vmatpush1.xpose.msra.mxu0 0.0
        %747 = vmatprep.subr.mxu0 0.0
        %748 = vmatpush1.xpose.msra.mxu0 0.0
        %749 = vmatprep.subr.mxu0 0.0
        %750 = vmatpush1.xpose.msra.mxu0 0.0
        %751 = vmatprep.subr.mxu0 0.0
        %752 = vmatpush1.xpose.msra.mxu0 0.0
        %753 = vmatprep.subr.mxu0 0.0
        %754 = vmatpush1.xpose.msra.mxu0 0.0
        %755 = vmatprep.subr.mxu0 0.0
        %756 = vmatpush1.xpose.msra.mxu0 0.0
        %757 = vmatprep.subr.mxu0 0.0
        %758 = vmatpush1.xpose.msra.mxu0 0.0
        %759 = vmatprep.subr.mxu0 0.0
        %760 = vmatpush1.xpose.msra.mxu0 0.0
        %761 = vmatprep.subr.mxu0 0.0
        %762 = vmatpush1.xpose.msra.mxu0 0.0
        %763 = vmatprep.subr.mxu0 0.0
        %764 = vmatpush1.xpose.msra.mxu0 0.0
        %765 = vmatprep.subr.mxu0 0.0
        %766 = vmatpush1.xpose.msra.mxu0 0.0
        %767 = vmatprep.subr.mxu0 0.0
        %768 = vmatpush1.xpose.msra.mxu0 0.0
        %769 = vmatprep.subr.mxu0 0.0
        %770 = vmatpush1.xpose.msra.mxu0 0.0
        %771 = vmatprep.subr.mxu0 0.0
        %772 = vmatpush1.xpose.msra.mxu0 0.0
        %773 = vmatprep.subr.mxu0 0.0
        %774 = vmatpush1.xpose.msra.mxu0 0.0
        %775 = vmatprep.subr.mxu0 0.0
        %776 = vmatpush1.xpose.msra.mxu0 0.0
        %777 = vmatprep.subr.mxu0 0.0
        %778 = vmatpush1.xpose.msra.mxu0 0.0
        %779 = vmatprep.subr.mxu0 0.0
        %780 = vmatpush1.xpose.msra.mxu0 0.0
        %781 = vmatprep.subr.mxu0 0.0
        %782 = vmatpush1.xpose.msra.mxu0 0.0
        %783 = vmatprep.subr.mxu0 0.0
        %784 = vmatpush1.xpose.msra.mxu0 0.0
        %785 = vmatprep.subr.mxu0 0.0
        %786 = vmatpush1.xpose.msra.mxu0 0.0
        %787 = vmatprep.subr.mxu0 0.0
        %788 = vmatpush1.xpose.msra.mxu0 0.0
        %789 = vmatprep.subr.mxu0 0.0
        %790 = vmatpush1.xpose.msra.mxu0 0.0
        %791 = vmatprep.subr.mxu0 0.0
        %792 = vmatpush1.xpose.msra.mxu0 0.0
        %793 = vmatprep.subr.mxu0 0.0
        %794 = vmatpush1.xpose.msra.mxu0 0.0
        %795 = vmatprep.subr.mxu0 0.0
        %796 = vmatpush1.xpose.msra.mxu0 0.0
        %797 = vmatprep.mubr.f32.mxu0 0.0
        %798 = vmatmul.mubr.f32.gmra.mrb[0].mxu0 %v549
        %v799 = vpop.f32.mrb[0].mxu0
        %v800 = vadd.f32 %v725, %v799
        %v801 = vpop.f32.mrb[0].mxu0
        %802 = vdwg.mxu0
        %v803 = vld [vmem:[%s9] sm:$0xff]
        %v804 = vld [vmem:[%s10] sm:$0xff]
        %v805 = vld [vmem:[%s11] sm:$0xff]
        %v806 = vld [vmem:[%s11 + $0x8] sm:$0xff]
        %v807 = vld [vmem:[%s11 + $0x10] sm:$0xff]
        %v808 = vld [vmem:[%s11 + $0x18] sm:$0xff]
        %v809 = vmul.f32 %v630, %v803
        %v811 = vsel %vm547, %v630, 0
        %813 = vmatprep.subr.mxu0 0.0
        %814 = vmatpush1.msra.mxu0 %v805
        %815 = vmatprep.subr.mxu0 0.0
        %816 = vmatpush1.msra.mxu0 %v806
        %817 = vmatprep.subr.mxu0 0.0
        %818 = vmatpush1.msra.mxu0 %v807
        %819 = vmatprep.subr.mxu0 0.0
        %820 = vmatpush1.msra.mxu0 %v808
        %821 = vmatprep.subr.mxu0 0.0
        %822 = vmatpush1.msra.mxu0 0.0
        %823 = vmatprep.subr.mxu0 0.0
        %824 = vmatpush1.msra.mxu0 0.0
        %825 = vmatprep.subr.mxu0 0.0
        %826 = vmatpush1.msra.mxu0 0.0
        %827 = vmatprep.subr.mxu0 0.0
        %828 = vmatpush1.msra.mxu0 0.0
        %829 = vmatprep.subr.mxu0 0.0
        %830 = vmatpush1.msra.mxu0 0.0
        %831 = vmatprep.subr.mxu0 0.0
        %832 = vmatpush1.msra.mxu0 0.0
        %833 = vmatprep.subr.mxu0 0.0
        %834 = vmatpush1.msra.mxu0 0.0
        %835 = vmatprep.subr.mxu0 0.0
        %836 = vmatpush1.msra.mxu0 0.0
        %837 = vmatprep.subr.mxu0 0.0
        %838 = vmatpush1.msra.mxu0 0.0
        %839 = vmatprep.subr.mxu0 0.0
        %840 = vmatpush1.msra.mxu0 0.0
        %841 = vmatprep.subr.mxu0 0.0
        %842 = vmatpush1.msra.mxu0 0.0
        %843 = vmatprep.subr.mxu0 0.0
        %844 = vmatpush1.msra.mxu0 0.0
        %845 = vmatprep.subr.mxu0 0.0
        %846 = vmatpush1.msra.mxu0 0.0
        %847 = vmatprep.subr.mxu0 0.0
        %848 = vmatpush1.msra.mxu0 0.0
        %849 = vmatprep.subr.mxu0 0.0
        %850 = vmatpush1.msra.mxu0 0.0
        %851 = vmatprep.subr.mxu0 0.0
        %852 = vmatpush1.msra.mxu0 0.0
        %853 = vmatprep.subr.mxu0 0.0
        %854 = vmatpush1.msra.mxu0 0.0
        %855 = vmatprep.subr.mxu0 0.0
        %856 = vmatpush1.msra.mxu0 0.0
        %857 = vmatprep.subr.mxu0 0.0
        %858 = vmatpush1.msra.mxu0 0.0
        %859 = vmatprep.subr.mxu0 0.0
        %860 = vmatpush1.msra.mxu0 0.0
        %861 = vmatprep.subr.mxu0 0.0
        %862 = vmatpush1.msra.mxu0 0.0
        %863 = vmatprep.subr.mxu0 0.0
        %864 = vmatpush1.msra.mxu0 0.0
        %865 = vmatprep.subr.mxu0 0.0
        %866 = vmatpush1.msra.mxu0 0.0
        %867 = vmatprep.subr.mxu0 0.0
        %868 = vmatpush1.msra.mxu0 0.0
        %869 = vmatprep.subr.mxu0 0.0
        %870 = vmatpush1.msra.mxu0 0.0
        %871 = vmatprep.subr.mxu0 0.0
        %872 = vmatpush1.msra.mxu0 0.0
        %873 = vmatprep.subr.mxu0 0.0
        %874 = vmatpush1.msra.mxu0 0.0
        %875 = vmatprep.subr.mxu0 0.0
        %876 = vmatpush1.msra.mxu0 0.0
        %877 = vmatprep.mubr.f32.mxu0 0.0
        %878 = vmatmul.mubr.f32.gmra.mrb[0].mxu0 %v811
        %v879 = vpop.f32.mrb[0].mxu0
        %v880 = vadd.f32 0.0, %v879
        %v881 = vpop.f32.mrb[0].mxu0
        %882 = vdwg.mxu0
        %v883 = vmul.f32 %v880, %v804
        %v884 = vadd.f32 %v809, %v883
        %v885 = vmul.f32 %v715, %v803
        %vm886 = vcmask 130048
        %v888 = vsel %vm886, %v715, 0
        %890 = vmatprep.subr.mxu0 0.0
        %891 = vmatpush1.msra.mxu0 %v805
        %892 = vmatprep.subr.mxu0 0.0
        %893 = vmatpush1.msra.mxu0 %v806
        %894 = vmatprep.subr.mxu0 0.0
        %895 = vmatpush1.msra.mxu0 0.0
        %896 = vmatprep.subr.mxu0 0.0
        %897 = vmatpush1.msra.mxu0 0.0
        %898 = vmatprep.subr.mxu0 0.0
        %899 = vmatpush1.msra.mxu0 0.0
        %900 = vmatprep.subr.mxu0 0.0
        %901 = vmatpush1.msra.mxu0 0.0
        %902 = vmatprep.subr.mxu0 0.0
        %903 = vmatpush1.msra.mxu0 0.0
        %904 = vmatprep.subr.mxu0 0.0
        %905 = vmatpush1.msra.mxu0 0.0
        %906 = vmatprep.subr.mxu0 0.0
        %907 = vmatpush1.msra.mxu0 0.0
        %908 = vmatprep.subr.mxu0 0.0
        %909 = vmatpush1.msra.mxu0 0.0
        %910 = vmatprep.subr.mxu0 0.0
        %911 = vmatpush1.msra.mxu0 0.0
        %912 = vmatprep.subr.mxu0 0.0
        %913 = vmatpush1.msra.mxu0 0.0
        %914 = vmatprep.subr.mxu0 0.0
        %915 = vmatpush1.msra.mxu0 0.0
        %916 = vmatprep.subr.mxu0 0.0
        %917 = vmatpush1.msra.mxu0 0.0
        %918 = vmatprep.subr.mxu0 0.0
        %919 = vmatpush1.msra.mxu0 0.0
        %920 = vmatprep.subr.mxu0 0.0
        %921 = vmatpush1.msra.mxu0 0.0
        %922 = vmatprep.subr.mxu0 0.0
        %923 = vmatpush1.msra.mxu0 0.0
        %924 = vmatprep.subr.mxu0 0.0
        %925 = vmatpush1.msra.mxu0 0.0
        %926 = vmatprep.subr.mxu0 0.0
        %927 = vmatpush1.msra.mxu0 0.0
        %928 = vmatprep.subr.mxu0 0.0
        %929 = vmatpush1.msra.mxu0 0.0
        %930 = vmatprep.subr.mxu0 0.0
        %931 = vmatpush1.msra.mxu0 0.0
        %932 = vmatprep.subr.mxu0 0.0
        %933 = vmatpush1.msra.mxu0 0.0
        %934 = vmatprep.subr.mxu0 0.0
        %935 = vmatpush1.msra.mxu0 0.0
        %936 = vmatprep.subr.mxu0 0.0
        %937 = vmatpush1.msra.mxu0 0.0
        %938 = vmatprep.subr.mxu0 0.0
        %939 = vmatpush1.msra.mxu0 0.0
        %940 = vmatprep.subr.mxu0 0.0
        %941 = vmatpush1.msra.mxu0 0.0
        %942 = vmatprep.subr.mxu0 0.0
        %943 = vmatpush1.msra.mxu0 0.0
        %944 = vmatprep.subr.mxu0 0.0
        %945 = vmatpush1.msra.mxu0 0.0
        %946 = vmatprep.subr.mxu0 0.0
        %947 = vmatpush1.msra.mxu0 0.0
        %948 = vmatprep.subr.mxu0 0.0
        %949 = vmatpush1.msra.mxu0 0.0
        %950 = vmatprep.subr.mxu0 0.0
        %951 = vmatpush1.msra.mxu0 0.0
        %952 = vmatprep.subr.mxu0 0.0
        %953 = vmatpush1.msra.mxu0 0.0
        %954 = vmatprep.mubr.f32.mxu0 0.0
        %955 = vmatmul.mubr.f32.gmra.mrb[0].mxu0 %v888
        %v956 = vpop.f32.mrb[0].mxu0
        %v957 = vadd.f32 0.0, %v956
        %v958 = vpop.f32.mrb[0].mxu0
        %959 = vdwg.mxu0
        %v960 = vmul.f32 %v957, %v804
        %v961 = vadd.f32 %v885, %v960
        %v962 = vlaneseq
        %v963 = vshrl.u32 %v962, 7
        %v964 = vlaneseq
        %v965 = vand.u32 %v964, 127
        %vm966 = vcmp.le.s32.totalorder %v965, %v963
        %vm967 = vcmask 64512
        %v969 = vsel %vm967, %v884, 0
        %v972 = vsel %vm967, %v961, 0
        %974 = vmatprep.subr.mxu0 0.0
        %975 = vmatpush1.xpose.msra.mxu0 %v972
        %976 = vmatprep.subr.mxu0 0.0
        %977 = vmatpush1.xpose.msra.mxu0 0.0
        %978 = vmatprep.subr.mxu0 0.0
        %979 = vmatpush1.xpose.msra.mxu0 0.0
        %980 = vmatprep.subr.mxu0 0.0
        %981 = vmatpush1.xpose.msra.mxu0 0.0
        %982 = vmatprep.subr.mxu0 0.0
        %983 = vmatpush1.xpose.msra.mxu0 0.0
        %984 = vmatprep.subr.mxu0 0.0
        %985 = vmatpush1.xpose.msra.mxu0 0.0
        %986 = vmatprep.subr.mxu0 0.0
        %987 = vmatpush1.xpose.msra.mxu0 0.0
        %988 = vmatprep.subr.mxu0 0.0
        %989 = vmatpush1.xpose.msra.mxu0 0.0
        %990 = vmatprep.subr.mxu0 0.0
        %991 = vmatpush1.xpose.msra.mxu0 0.0
        %992 = vmatprep.subr.mxu0 0.0
        %993 = vmatpush1.xpose.msra.mxu0 0.0
        %994 = vmatprep.subr.mxu0 0.0
        %995 = vmatpush1.xpose.msra.mxu0 0.0
        %996 = vmatprep.subr.mxu0 0.0
        %997 = vmatpush1.xpose.msra.mxu0 0.0
        %998 = vmatprep.subr.mxu0 0.0
        %999 = vmatpush1.xpose.msra.mxu0 0.0
        %1000 = vmatprep.subr.mxu0 0.0
        %1001 = vmatpush1.xpose.msra.mxu0 0.0
        %1002 = vmatprep.subr.mxu0 0.0
        %1003 = vmatpush1.xpose.msra.mxu0 0.0
        %1004 = vmatprep.subr.mxu0 0.0
        %1005 = vmatpush1.xpose.msra.mxu0 0.0
        %1006 = vmatprep.subr.mxu0 0.0
        %1007 = vmatpush1.xpose.msra.mxu0 0.0
        %1008 = vmatprep.subr.mxu0 0.0
        %1009 = vmatpush1.xpose.msra.mxu0 0.0
        %1010 = vmatprep.subr.mxu0 0.0
        %1011 = vmatpush1.xpose.msra.mxu0 0.0
        %1012 = vmatprep.subr.mxu0 0.0
        %1013 = vmatpush1.xpose.msra.mxu0 0.0
        %1014 = vmatprep.subr.mxu0 0.0
        %1015 = vmatpush1.xpose.msra.mxu0 0.0
        %1016 = vmatprep.subr.mxu0 0.0
        %1017 = vmatpush1.xpose.msra.mxu0 0.0
        %1018 = vmatprep.subr.mxu0 0.0
        %1019 = vmatpush1.xpose.msra.mxu0 0.0
        %1020 = vmatprep.subr.mxu0 0.0
        %1021 = vmatpush1.xpose.msra.mxu0 0.0
        %1022 = vmatprep.subr.mxu0 0.0
        %1023 = vmatpush1.xpose.msra.mxu0 0.0
        %1024 = vmatprep.subr.mxu0 0.0
        %1025 = vmatpush1.xpose.msra.mxu0 0.0
        %1026 = vmatprep.subr.mxu0 0.0
        %1027 = vmatpush1.xpose.msra.mxu0 0.0
        %1028 = vmatprep.subr.mxu0 0.0
        %1029 = vmatpush1.xpose.msra.mxu0 0.0
        %1030 = vmatprep.subr.mxu0 0.0
        %1031 = vmatpush1.xpose.msra.mxu0 0.0
        %1032 = vmatprep.subr.mxu0 0.0
        %1033 = vmatpush1.xpose.msra.mxu0 0.0
        %1034 = vmatprep.subr.mxu0 0.0
        %1035 = vmatpush1.xpose.msra.mxu0 0.0
        %1036 = vmatprep.subr.mxu0 0.0
        %1037 = vmatpush1.xpose.msra.mxu0 0.0
        %1038 = vmatprep.mubr.f32.mxu0 0.0
        %1039 = vmatmul.mubr.f32.gmra.mrb[0].mxu0 %v969
        %v1040 = vpop.f32.mrb[0].mxu0
        %v1041 = vadd.f32 0.0, %v1040
        %v1042 = vpop.f32.mrb[0].mxu0
        %1043 = vdwg.mxu0
        %v1044 = vmul.f32 %v1041, 0.35355338
        %v1045 = vsel %vm966, %v1044, -1e+30
        %v1046 = vsel %vm967, %v1045, -inf
        %1047 = vmax.xlane.f32.xlu0 %v1046
        %v1048 = vpop.xlane.xlu0 %1047
        %v1049 = vsub.f32 %v1045, %v1048
        %v1050 = vmul.f32 %v1049, 1.442695
        %v1051 = vpow.pop %v1050
        %v1052 = vsel %vm967, %v1051, 0.0
        %1053 = vadd.xlane.f32.xlu0 %v1052
        %v1054 = vpop.xlane.xlu0 %1053
        %v1055 = vrcp.pop %v1054
        %v1056 = vmul.f32 %v1051, %v1055
        %1057 = vst.msk [vmem:[%s512] sm:$0xff] %vm967, %v1056
        %v1059 = vsel %vm967, %v1056, 0
        %1061 = vmatprep.subr.mxu0 0.0
        %1062 = vmatpush1.msra.mxu0 %v800
        %1063 = vmatprep.subr.mxu0 0.0
        %1064 = vmatpush1.msra.mxu0 0.0
        %1065 = vmatprep.subr.mxu0 0.0
        %1066 = vmatpush1.msra.mxu0 0.0
        %1067 = vmatprep.subr.mxu0 0.0
        %1068 = vmatpush1.msra.mxu0 0.0
        %1069 = vmatprep.subr.mxu0 0.0
        %1070 = vmatpush1.msra.mxu0 0.0
        %1071 = vmatprep.subr.mxu0 0.0
        %1072 = vmatpush1.msra.mxu0 0.0
        %1073 = vmatprep.subr.mxu0 0.0
        %1074 = vmatpush1.msra.mxu0 0.0
        %1075 = vmatprep.subr.mxu0 0.0
        %1076 = vmatpush1.msra.mxu0 0.0
        %1077 = vmatprep.subr.mxu0 0.0
        %1078 = vmatpush1.msra.mxu0 0.0
        %1079 = vmatprep.subr.mxu0 0.0
        %1080 = vmatpush1.msra.mxu0 0.0
        %1081 = vmatprep.subr.mxu0 0.0
        %1082 = vmatpush1.msra.mxu0 0.0
        %1083 = vmatprep.subr.mxu0 0.0
        %1084 = vmatpush1.msra.mxu0 0.0
        %1085 = vmatprep.subr.mxu0 0.0
        %1086 = vmatpush1.msra.mxu0 0.0
        %1087 = vmatprep.subr.mxu0 0.0
        %1088 = vmatpush1.msra.mxu0 0.0
        %1089 = vmatprep.subr.mxu0 0.0
        %1090 = vmatpush1.msra.mxu0 0.0
        %1091 = vmatprep.subr.mxu0 0.0
        %1092 = vmatpush1.msra.mxu0 0.0
        %1093 = vmatprep.subr.mxu0 0.0
        %1094 = vmatpush1.msra.mxu0 0.0
        %1095 = vmatprep.subr.mxu0 0.0
        %1096 = vmatpush1.msra.mxu0 0.0
        %1097 = vmatprep.subr.mxu0 0.0
        %1098 = vmatpush1.msra.mxu0 0.0
        %1099 = vmatprep.subr.mxu0 0.0
        %1100 = vmatpush1.msra.mxu0 0.0
        %1101 = vmatprep.subr.mxu0 0.0
        %1102 = vmatpush1.msra.mxu0 0.0
        %1103 = vmatprep.subr.mxu0 0.0
        %1104 = vmatpush1.msra.mxu0 0.0
        %1105 = vmatprep.subr.mxu0 0.0
        %1106 = vmatpush1.msra.mxu0 0.0
        %1107 = vmatprep.subr.mxu0 0.0
        %1108 = vmatpush1.msra.mxu0 0.0
        %1109 = vmatprep.subr.mxu0 0.0
        %1110 = vmatpush1.msra.mxu0 0.0
        %1111 = vmatprep.subr.mxu0 0.0
        %1112 = vmatpush1.msra.mxu0 0.0
        %1113 = vmatprep.subr.mxu0 0.0
        %1114 = vmatpush1.msra.mxu0 0.0
        %1115 = vmatprep.subr.mxu0 0.0
        %1116 = vmatpush1.msra.mxu0 0.0
        %1117 = vmatprep.subr.mxu0 0.0
        %1118 = vmatpush1.msra.mxu0 0.0
        %1119 = vmatprep.subr.mxu0 0.0
        %1120 = vmatpush1.msra.mxu0 0.0
        %1121 = vmatprep.subr.mxu0 0.0
        %1122 = vmatpush1.msra.mxu0 0.0
        %1123 = vmatprep.subr.mxu0 0.0
        %1124 = vmatpush1.msra.mxu0 0.0
        %1125 = vmatprep.mubr.f32.mxu0 0.0
        %1126 = vmatmul.mubr.f32.gmra.mrb[0].mxu0 %v1059
        %v1127 = vpop.f32.mrb[0].mxu0
        %v1128 = vadd.f32 0.0, %v1127
        %v1129 = vpop.f32.mrb[0].mxu0
        %1130 = vdwg.mxu0
        %1131 = vrot.lane.b32.xlu0 %v884, 120
        %v1132 = vpop.permute.xlu0 %1131
        %v1133 = vsel %vm967, %v1132, 0
        %1135 = vmatprep.subr.mxu0 0.0
        %1136 = vmatpush1.xpose.msra.mxu0 %v972
        %1137 = vmatprep.subr.mxu0 0.0
        %1138 = vmatpush1.xpose.msra.mxu0 0.0
        %1139 = vmatprep.subr.mxu0 0.0
        %1140 = vmatpush1.xpose.msra.mxu0 0.0
        %1141 = vmatprep.subr.mxu0 0.0
        %1142 = vmatpush1.xpose.msra.mxu0 0.0
        %1143 = vmatprep.subr.mxu0 0.0
        %1144 = vmatpush1.xpose.msra.mxu0 0.0
        %1145 = vmatprep.subr.mxu0 0.0
        %1146 = vmatpush1.xpose.msra.mxu0 0.0
        %1147 = vmatprep.subr.mxu0 0.0
        %1148 = vmatpush1.xpose.msra.mxu0 0.0
        %1149 = vmatprep.subr.mxu0 0.0
        %1150 = vmatpush1.xpose.msra.mxu0 0.0
        %1151 = vmatprep.subr.mxu0 0.0
        %1152 = vmatpush1.xpose.msra.mxu0 0.0
        %1153 = vmatprep.subr.mxu0 0.0
        %1154 = vmatpush1.xpose.msra.mxu0 0.0
        %1155 = vmatprep.subr.mxu0 0.0
        %1156 = vmatpush1.xpose.msra.mxu0 0.0
        %1157 = vmatprep.subr.mxu0 0.0
        %1158 = vmatpush1.xpose.msra.mxu0 0.0
        %1159 = vmatprep.subr.mxu0 0.0
        %1160 = vmatpush1.xpose.msra.mxu0 0.0
        %1161 = vmatprep.subr.mxu0 0.0
        %1162 = vmatpush1.xpose.msra.mxu0 0.0
        %1163 = vmatprep.subr.mxu0 0.0
        %1164 = vmatpush1.xpose.msra.mxu0 0.0
        %1165 = vmatprep.subr.mxu0 0.0
        %1166 = vmatpush1.xpose.msra.mxu0 0.0
        %1167 = vmatprep.subr.mxu0 0.0
        %1168 = vmatpush1.xpose.msra.mxu0 0.0
        %1169 = vmatprep.subr.mxu0 0.0
        %1170 = vmatpush1.xpose.msra.mxu0 0.0
        %1171 = vmatprep.subr.mxu0 0.0
        %1172 = vmatpush1.xpose.msra.mxu0 0.0
        %1173 = vmatprep.subr.mxu0 0.0
        %1174 = vmatpush1.xpose.msra.mxu0 0.0
        %1175 = vmatprep.subr.mxu0 0.0
        %1176 = vmatpush1.xpose.msra.mxu0 0.0
        %1177 = vmatprep.subr.mxu0 0.0
        %1178 = vmatpush1.xpose.msra.mxu0 0.0
        %1179 = vmatprep.subr.mxu0 0.0
        %1180 = vmatpush1.xpose.msra.mxu0 0.0
        %1181 = vmatprep.subr.mxu0 0.0
        %1182 = vmatpush1.xpose.msra.mxu0 0.0
        %1183 = vmatprep.subr.mxu0 0.0
        %1184 = vmatpush1.xpose.msra.mxu0 0.0
        %1185 = vmatprep.subr.mxu0 0.0
        %1186 = vmatpush1.xpose.msra.mxu0 0.0
        %1187 = vmatprep.subr.mxu0 0.0
        %1188 = vmatpush1.xpose.msra.mxu0 0.0
        %1189 = vmatprep.subr.mxu0 0.0
        %1190 = vmatpush1.xpose.msra.mxu0 0.0
        %1191 = vmatprep.subr.mxu0 0.0
        %1192 = vmatpush1.xpose.msra.mxu0 0.0
        %1193 = vmatprep.subr.mxu0 0.0
        %1194 = vmatpush1.xpose.msra.mxu0 0.0
        %1195 = vmatprep.subr.mxu0 0.0
        %1196 = vmatpush1.xpose.msra.mxu0 0.0
        %1197 = vmatprep.subr.mxu0 0.0
        %1198 = vmatpush1.xpose.msra.mxu0 0.0
        %1199 = vmatprep.mubr.f32.mxu0 0.0
        %1200 = vmatmul.mubr.f32.gmra.mrb[0].mxu0 %v1133
        %v1201 = vpop.f32.mrb[0].mxu0
        %v1202 = vadd.f32 0.0, %v1201
        %v1203 = vpop.f32.mrb[0].mxu0
        %1204 = vdwg.mxu0
        %v1205 = vmul.f32 %v1202, 0.35355338
        %v1206 = vsel %vm966, %v1205, -1e+30
        %v1207 = vsel %vm967, %v1206, -inf
        %1208 = vmax.xlane.f32.xlu0 %v1207
        %v1209 = vpop.xlane.xlu0 %1208
        %v1210 = vsub.f32 %v1206, %v1209
        %v1211 = vmul.f32 %v1210, 1.442695
        %v1212 = vpow.pop %v1211
        %v1213 = vsel %vm967, %v1212, 0.0
        %1214 = vadd.xlane.f32.xlu0 %v1213
        %v1215 = vpop.xlane.xlu0 %1214
        %v1216 = vrcp.pop %v1215
        %v1217 = vmul.f32 %v1212, %v1216
        %s1218 = scalar_lea.vmem %s512, 8 [#allocation4]
        %1219 = vst.msk [vmem:[%s1218] sm:$0xff] %vm967, %v1217
        %v1221 = vsel %vm967, %v1217, 0
        %1223 = vmatprep.subr.mxu0 0.0
        %1224 = vmatpush1.msra.mxu0 %v800
        %1225 = vmatprep.subr.mxu0 0.0
        %1226 = vmatpush1.msra.mxu0 0.0
        %1227 = vmatprep.subr.mxu0 0.0
        %1228 = vmatpush1.msra.mxu0 0.0
        %1229 = vmatprep.subr.mxu0 0.0
        %1230 = vmatpush1.msra.mxu0 0.0
        %1231 = vmatprep.subr.mxu0 0.0
        %1232 = vmatpush1.msra.mxu0 0.0
        %1233 = vmatprep.subr.mxu0 0.0
        %1234 = vmatpush1.msra.mxu0 0.0
        %1235 = vmatprep.subr.mxu0 0.0
        %1236 = vmatpush1.msra.mxu0 0.0
        %1237 = vmatprep.subr.mxu0 0.0
        %1238 = vmatpush1.msra.mxu0 0.0
        %1239 = vmatprep.subr.mxu0 0.0
        %1240 = vmatpush1.msra.mxu0 0.0
        %1241 = vmatprep.subr.mxu0 0.0
        %1242 = vmatpush1.msra.mxu0 0.0
        %1243 = vmatprep.subr.mxu0 0.0
        %1244 = vmatpush1.msra.mxu0 0.0
        %1245 = vmatprep.subr.mxu0 0.0
        %1246 = vmatpush1.msra.mxu0 0.0
        %1247 = vmatprep.subr.mxu0 0.0
        %1248 = vmatpush1.msra.mxu0 0.0
        %1249 = vmatprep.subr.mxu0 0.0
        %1250 = vmatpush1.msra.mxu0 0.0
        %1251 = vmatprep.subr.mxu0 0.0
        %1252 = vmatpush1.msra.mxu0 0.0
        %1253 = vmatprep.subr.mxu0 0.0
        %1254 = vmatpush1.msra.mxu0 0.0
        %1255 = vmatprep.subr.mxu0 0.0
        %1256 = vmatpush1.msra.mxu0 0.0
        %1257 = vmatprep.subr.mxu0 0.0
        %1258 = vmatpush1.msra.mxu0 0.0
        %1259 = vmatprep.subr.mxu0 0.0
        %1260 = vmatpush1.msra.mxu0 0.0
        %1261 = vmatprep.subr.mxu0 0.0
        %1262 = vmatpush1.msra.mxu0 0.0
        %1263 = vmatprep.subr.mxu0 0.0
        %1264 = vmatpush1.msra.mxu0 0.0
        %1265 = vmatprep.subr.mxu0 0.0
        %1266 = vmatpush1.msra.mxu0 0.0
        %1267 = vmatprep.subr.mxu0 0.0
        %1268 = vmatpush1.msra.mxu0 0.0
        %1269 = vmatprep.subr.mxu0 0.0
        %1270 = vmatpush1.msra.mxu0 0.0
        %1271 = vmatprep.subr.mxu0 0.0
        %1272 = vmatpush1.msra.mxu0 0.0
        %1273 = vmatprep.subr.mxu0 0.0
        %1274 = vmatpush1.msra.mxu0 0.0
        %1275 = vmatprep.subr.mxu0 0.0
        %1276 = vmatpush1.msra.mxu0 0.0
        %1277 = vmatprep.subr.mxu0 0.0
        %1278 = vmatpush1.msra.mxu0 0.0
        %1279 = vmatprep.subr.mxu0 0.0
        %1280 = vmatpush1.msra.mxu0 0.0
        %1281 = vmatprep.subr.mxu0 0.0
        %1282 = vmatpush1.msra.mxu0 0.0
        %1283 = vmatprep.subr.mxu0 0.0
        %1284 = vmatpush1.msra.mxu0 0.0
        %1285 = vmatprep.subr.mxu0 0.0
        %1286 = vmatpush1.msra.mxu0 0.0
        %1287 = vmatprep.mubr.f32.mxu0 0.0
        %1288 = vmatmul.mubr.f32.gmra.mrb[0].mxu0 %v1221
        %v1289 = vpop.f32.mrb[0].mxu0
        %v1290 = vadd.f32 0.0, %v1289
        %v1291 = vpop.f32.mrb[0].mxu0
        %1292 = vdwg.mxu0
        %1293 = vrot.lane.b32.xlu0 %v884, 112
        %v1294 = vpop.permute.xlu0 %1293
        %1295 = vrot.lane.b32.xlu0 %v961, 120
        %v1296 = vpop.permute.xlu0 %1295
        %v1297 = vsel %vm967, %v1294, 0
        %v1299 = vsel %vm967, %v1296, 0
        %1301 = vmatprep.subr.mxu0 0.0
        %1302 = vmatpush1.xpose.msra.mxu0 %v1299
        %1303 = vmatprep.subr.mxu0 0.0
        %1304 = vmatpush1.xpose.msra.mxu0 0.0
        %1305 = vmatprep.subr.mxu0 0.0
        %1306 = vmatpush1.xpose.msra.mxu0 0.0
        %1307 = vmatprep.subr.mxu0 0.0
        %1308 = vmatpush1.xpose.msra.mxu0 0.0
        %1309 = vmatprep.subr.mxu0 0.0
        %1310 = vmatpush1.xpose.msra.mxu0 0.0
        %1311 = vmatprep.subr.mxu0 0.0
        %1312 = vmatpush1.xpose.msra.mxu0 0.0
        %1313 = vmatprep.subr.mxu0 0.0
        %1314 = vmatpush1.xpose.msra.mxu0 0.0
        %1315 = vmatprep.subr.mxu0 0.0
        %1316 = vmatpush1.xpose.msra.mxu0 0.0
        %1317 = vmatprep.subr.mxu0 0.0
        %1318 = vmatpush1.xpose.msra.mxu0 0.0
        %1319 = vmatprep.subr.mxu0 0.0
        %1320 = vmatpush1.xpose.msra.mxu0 0.0
        %1321 = vmatprep.subr.mxu0 0.0
        %1322 = vmatpush1.xpose.msra.mxu0 0.0
        %1323 = vmatprep.subr.mxu0 0.0
        %1324 = vmatpush1.xpose.msra.mxu0 0.0
        %1325 = vmatprep.subr.mxu0 0.0
        %1326 = vmatpush1.xpose.msra.mxu0 0.0
        %1327 = vmatprep.subr.mxu0 0.0
        %1328 = vmatpush1.xpose.msra.mxu0 0.0
        %1329 = vmatprep.subr.mxu0 0.0
        %1330 = vmatpush1.xpose.msra.mxu0 0.0
        %1331 = vmatprep.subr.mxu0 0.0
        %1332 = vmatpush1.xpose.msra.mxu0 0.0
        %1333 = vmatprep.subr.mxu0 0.0
        %1334 = vmatpush1.xpose.msra.mxu0 0.0
        %1335 = vmatprep.subr.mxu0 0.0
        %1336 = vmatpush1.xpose.msra.mxu0 0.0
        %1337 = vmatprep.subr.mxu0 0.0
        %1338 = vmatpush1.xpose.msra.mxu0 0.0
        %1339 = vmatprep.subr.mxu0 0.0
        %1340 = vmatpush1.xpose.msra.mxu0 0.0
        %1341 = vmatprep.subr.mxu0 0.0
        %1342 = vmatpush1.xpose.msra.mxu0 0.0
        %1343 = vmatprep.subr.mxu0 0.0
        %1344 = vmatpush1.xpose.msra.mxu0 0.0
        %1345 = vmatprep.subr.mxu0 0.0
        %1346 = vmatpush1.xpose.msra.mxu0 0.0
        %1347 = vmatprep.subr.mxu0 0.0
        %1348 = vmatpush1.xpose.msra.mxu0 0.0
        %1349 = vmatprep.subr.mxu0 0.0
        %1350 = vmatpush1.xpose.msra.mxu0 0.0
        %1351 = vmatprep.subr.mxu0 0.0
        %1352 = vmatpush1.xpose.msra.mxu0 0.0
        %1353 = vmatprep.subr.mxu0 0.0
        %1354 = vmatpush1.xpose.msra.mxu0 0.0
        %1355 = vmatprep.subr.mxu0 0.0
        %1356 = vmatpush1.xpose.msra.mxu0 0.0
        %1357 = vmatprep.subr.mxu0 0.0
        %1358 = vmatpush1.xpose.msra.mxu0 0.0
        %1359 = vmatprep.subr.mxu0 0.0
        %1360 = vmatpush1.xpose.msra.mxu0 0.0
        %1361 = vmatprep.subr.mxu0 0.0
        %1362 = vmatpush1.xpose.msra.mxu0 0.0
        %1363 = vmatprep.subr.mxu0 0.0
        %1364 = vmatpush1.xpose.msra.mxu0 0.0
        %1365 = vmatprep.mubr.f32.mxu0 0.0
        %1366 = vmatmul.mubr.f32.gmra.mrb[0].mxu0 %v1297
        %v1367 = vpop.f32.mrb[0].mxu0
        %v1368 = vadd.f32 0.0, %v1367
        %v1369 = vpop.f32.mrb[0].mxu0
        %1370 = vdwg.mxu0
        %v1371 = vmul.f32 %v1368, 0.35355338
        %v1372 = vsel %vm966, %v1371, -1e+30
        %v1373 = vsel %vm967, %v1372, -inf
        %1374 = vmax.xlane.f32.xlu0 %v1373
        %v1375 = vpop.xlane.xlu0 %1374
        %v1376 = vsub.f32 %v1372, %v1375
        %v1377 = vmul.f32 %v1376, 1.442695
        %v1378 = vpow.pop %v1377
        %v1379 = vsel %vm967, %v1378, 0.0
        %1380 = vadd.xlane.f32.xlu0 %v1379
        %v1381 = vpop.xlane.xlu0 %1380
        %v1382 = vrcp.pop %v1381
        %v1383 = vmul.f32 %v1378, %v1382
        %s1384 = scalar_lea.vmem %s512, 16 [#allocation4]
        %1385 = vst.msk [vmem:[%s1384] sm:$0xff] %vm967, %v1383
        %1387 = vrot.lane.b32.xlu0 %v800, 120
        %v1388 = vpop.permute.xlu0 %1387
        %v1391 = vsel %vm967, %v1383, 0
        %1393 = vmatprep.subr.mxu0 0.0
        %1394 = vmatpush1.msra.mxu0 %v1388
        %1395 = vmatprep.subr.mxu0 0.0
        %1396 = vmatpush1.msra.mxu0 0.0
        %1397 = vmatprep.subr.mxu0 0.0
        %1398 = vmatpush1.msra.mxu0 0.0
        %1399 = vmatprep.subr.mxu0 0.0
        %1400 = vmatpush1.msra.mxu0 0.0
        %1401 = vmatprep.subr.mxu0 0.0
        %1402 = vmatpush1.msra.mxu0 0.0
        %1403 = vmatprep.subr.mxu0 0.0
        %1404 = vmatpush1.msra.mxu0 0.0
        %1405 = vmatprep.subr.mxu0 0.0
        %1406 = vmatpush1.msra.mxu0 0.0
        %1407 = vmatprep.subr.mxu0 0.0
        %1408 = vmatpush1.msra.mxu0 0.0
        %1409 = vmatprep.subr.mxu0 0.0
        %1410 = vmatpush1.msra.mxu0 0.0
        %1411 = vmatprep.subr.mxu0 0.0
        %1412 = vmatpush1.msra.mxu0 0.0
        %1413 = vmatprep.subr.mxu0 0.0
        %1414 = vmatpush1.msra.mxu0 0.0
        %1415 = vmatprep.subr.mxu0 0.0
        %1416 = vmatpush1.msra.mxu0 0.0
        %1417 = vmatprep.subr.mxu0 0.0
        %1418 = vmatpush1.msra.mxu0 0.0
        %1419 = vmatprep.subr.mxu0 0.0
        %1420 = vmatpush1.msra.mxu0 0.0
        %1421 = vmatprep.subr.mxu0 0.0
        %1422 = vmatpush1.msra.mxu0 0.0
        %1423 = vmatprep.subr.mxu0 0.0
        %1424 = vmatpush1.msra.mxu0 0.0
        %1425 = vmatprep.subr.mxu0 0.0
        %1426 = vmatpush1.msra.mxu0 0.0
        %1427 = vmatprep.subr.mxu0 0.0
        %1428 = vmatpush1.msra.mxu0 0.0
        %1429 = vmatprep.subr.mxu0 0.0
        %1430 = vmatpush1.msra.mxu0 0.0
        %1431 = vmatprep.subr.mxu0 0.0
        %1432 = vmatpush1.msra.mxu0 0.0
        %1433 = vmatprep.subr.mxu0 0.0
        %1434 = vmatpush1.msra.mxu0 0.0
        %1435 = vmatprep.subr.mxu0 0.0
        %1436 = vmatpush1.msra.mxu0 0.0
        %1437 = vmatprep.subr.mxu0 0.0
        %1438 = vmatpush1.msra.mxu0 0.0
        %1439 = vmatprep.subr.mxu0 0.0
        %1440 = vmatpush1.msra.mxu0 0.0
        %1441 = vmatprep.subr.mxu0 0.0
        %1442 = vmatpush1.msra.mxu0 0.0
        %1443 = vmatprep.subr.mxu0 0.0
        %1444 = vmatpush1.msra.mxu0 0.0
        %1445 = vmatprep.subr.mxu0 0.0
        %1446 = vmatpush1.msra.mxu0 0.0
        %1447 = vmatprep.subr.mxu0 0.0
        %1448 = vmatpush1.msra.mxu0 0.0
        %1449 = vmatprep.subr.mxu0 0.0
        %1450 = vmatpush1.msra.mxu0 0.0
        %1451 = vmatprep.subr.mxu0 0.0
        %1452 = vmatpush1.msra.mxu0 0.0
        %1453 = vmatprep.subr.mxu0 0.0
        %1454 = vmatpush1.msra.mxu0 0.0
        %1455 = vmatprep.subr.mxu0 0.0
        %1456 = vmatpush1.msra.mxu0 0.0
        %1457 = vmatprep.mubr.f32.mxu0 0.0
        %1458 = vmatmul.mubr.f32.gmra.mrb[0].mxu0 %v1391
        %v1459 = vpop.f32.mrb[0].mxu0
        %v1460 = vadd.f32 0.0, %v1459
        %v1461 = vpop.f32.mrb[0].mxu0
        %1462 = vdwg.mxu0
        %1463 = vrot.lane.b32.xlu0 %v884, 104
        %v1464 = vpop.permute.xlu0 %1463
        %v1465 = vsel %vm967, %v1464, 0
        %1467 = vmatprep.subr.mxu0 0.0
        %1468 = vmatpush1.xpose.msra.mxu0 %v1299
        %1469 = vmatprep.subr.mxu0 0.0
        %1470 = vmatpush1.xpose.msra.mxu0 0.0
        %1471 = vmatprep.subr.mxu0 0.0
        %1472 = vmatpush1.xpose.msra.mxu0 0.0
        %1473 = vmatprep.subr.mxu0 0.0
        %1474 = vmatpush1.xpose.msra.mxu0 0.0
        %1475 = vmatprep.subr.mxu0 0.0
        %1476 = vmatpush1.xpose.msra.mxu0 0.0
        %1477 = vmatprep.subr.mxu0 0.0
        %1478 = vmatpush1.xpose.msra.mxu0 0.0
        %1479 = vmatprep.subr.mxu0 0.0
        %1480 = vmatpush1.xpose.msra.mxu0 0.0
        %1481 = vmatprep.subr.mxu0 0.0
        %1482 = vmatpush1.xpose.msra.mxu0 0.0
        %1483 = vmatprep.subr.mxu0 0.0
        %1484 = vmatpush1.xpose.msra.mxu0 0.0
        %1485 = vmatprep.subr.mxu0 0.0
        %1486 = vmatpush1.xpose.msra.mxu0 0.0
        %1487 = vmatprep.subr.mxu0 0.0
        %1488 = vmatpush1.xpose.msra.mxu0 0.0
        %1489 = vmatprep.subr.mxu0 0.0
        %1490 = vmatpush1.xpose.msra.mxu0 0.0
        %1491 = vmatprep.subr.mxu0 0.0
        %1492 = vmatpush1.xpose.msra.mxu0 0.0
        %1493 = vmatprep.subr.mxu0 0.0
        %1494 = vmatpush1.xpose.msra.mxu0 0.0
        %1495 = vmatprep.subr.mxu0 0.0
        %1496 = vmatpush1.xpose.msra.mxu0 0.0
        %1497 = vmatprep.subr.mxu0 0.0
        %1498 = vmatpush1.xpose.msra.mxu0 0.0
        %1499 = vmatprep.subr.mxu0 0.0
        %1500 = vmatpush1.xpose.msra.mxu0 0.0
        %1501 = vmatprep.subr.mxu0 0.0
        %1502 = vmatpush1.xpose.msra.mxu0 0.0
        %1503 = vmatprep.subr.mxu0 0.0
        %1504 = vmatpush1.xpose.msra.mxu0 0.0
        %1505 = vmatprep.subr.mxu0 0.0
        %1506 = vmatpush1.xpose.msra.mxu0 0.0
        %1507 = vmatprep.subr.mxu0 0.0
        %1508 = vmatpush1.xpose.msra.mxu0 0.0
        %1509 = vmatprep.subr.mxu0 0.0
        %1510 = vmatpush1.xpose.msra.mxu0 0.0
        %1511 = vmatprep.subr.mxu0 0.0
        %1512 = vmatpush1.xpose.msra.mxu0 0.0
        %1513 = vmatprep.subr.mxu0 0.0
        %1514 = vmatpush1.xpose.msra.mxu0 0.0
        %1515 = vmatprep.subr.mxu0 0.0
        %1516 = vmatpush1.xpose.msra.mxu0 0.0
        %1517 = vmatprep.subr.mxu0 0.0
        %1518 = vmatpush1.xpose.msra.mxu0 0.0
        %1519 = vmatprep.subr.mxu0 0.0
        %1520 = vmatpush1.xpose.msra.mxu0 0.0
        %1521 = vmatprep.subr.mxu0 0.0
        %1522 = vmatpush1.xpose.msra.mxu0 0.0
        %1523 = vmatprep.subr.mxu0 0.0
        %1524 = vmatpush1.xpose.msra.mxu0 0.0
        %1525 = vmatprep.subr.mxu0 0.0
        %1526 = vmatpush1.xpose.msra.mxu0 0.0
        %1527 = vmatprep.subr.mxu0 0.0
        %1528 = vmatpush1.xpose.msra.mxu0 0.0
        %1529 = vmatprep.subr.mxu0 0.0
        %1530 = vmatpush1.xpose.msra.mxu0 0.0
        %1531 = vmatprep.mubr.f32.mxu0 0.0
        %1532 = vmatmul.mubr.f32.gmra.mrb[0].mxu0 %v1465
        %v1533 = vpop.f32.mrb[0].mxu0
        %v1534 = vadd.f32 0.0, %v1533
        %v1535 = vpop.f32.mrb[0].mxu0
        %1536 = vdwg.mxu0
        %v1537 = vmul.f32 %v1534, 0.35355338
        %v1538 = vsel %vm966, %v1537, -1e+30
        %v1539 = vsel %vm967, %v1538, -inf
        %1540 = vmax.xlane.f32.xlu0 %v1539
        %v1541 = vpop.xlane.xlu0 %1540
        %v1542 = vsub.f32 %v1538, %v1541
        %v1543 = vmul.f32 %v1542, 1.442695
        %v1544 = vpow.pop %v1543
        %v1545 = vsel %vm967, %v1544, 0.0
        %1546 = vadd.xlane.f32.xlu0 %v1545
        %v1547 = vpop.xlane.xlu0 %1546
        %v1548 = vrcp.pop %v1547
        %v1549 = vmul.f32 %v1544, %v1548
        %s1550 = scalar_lea.vmem %s512, 24 [#allocation4]
        %1551 = vst.msk [vmem:[%s1550] sm:$0xff] %vm967, %v1549
        %v1553 = vsel %vm967, %v1549, 0
        %1555 = vmatprep.subr.mxu0 0.0
        %1556 = vmatpush1.msra.mxu0 %v1388
        %1557 = vmatprep.subr.mxu0 0.0
        %1558 = vmatpush1.msra.mxu0 0.0
        %1559 = vmatprep.subr.mxu0 0.0
        %1560 = vmatpush1.msra.mxu0 0.0
        %1561 = vmatprep.subr.mxu0 0.0
        %1562 = vmatpush1.msra.mxu0 0.0
        %1563 = vmatprep.subr.mxu0 0.0
        %1564 = vmatpush1.msra.mxu0 0.0
        %1565 = vmatprep.subr.mxu0 0.0
        %1566 = vmatpush1.msra.mxu0 0.0
        %1567 = vmatprep.subr.mxu0 0.0
        %1568 = vmatpush1.msra.mxu0 0.0
        %1569 = vmatprep.subr.mxu0 0.0
        %1570 = vmatpush1.msra.mxu0 0.0
        %1571 = vmatprep.subr.mxu0 0.0
        %1572 = vmatpush1.msra.mxu0 0.0
        %1573 = vmatprep.subr.mxu0 0.0
        %1574 = vmatpush1.msra.mxu0 0.0
        %1575 = vmatprep.subr.mxu0 0.0
        %1576 = vmatpush1.msra.mxu0 0.0
        %1577 = vmatprep.subr.mxu0 0.0
        %1578 = vmatpush1.msra.mxu0 0.0
        %1579 = vmatprep.subr.mxu0 0.0
        %1580 = vmatpush1.msra.mxu0 0.0
        %1581 = vmatprep.subr.mxu0 0.0
        %1582 = vmatpush1.msra.mxu0 0.0
        %1583 = vmatprep.subr.mxu0 0.0
        %1584 = vmatpush1.msra.mxu0 0.0
        %1585 = vmatprep.subr.mxu0 0.0
        %1586 = vmatpush1.msra.mxu0 0.0
        %1587 = vmatprep.subr.mxu0 0.0
        %1588 = vmatpush1.msra.mxu0 0.0
        %1589 = vmatprep.subr.mxu0 0.0
        %1590 = vmatpush1.msra.mxu0 0.0
        %1591 = vmatprep.subr.mxu0 0.0
        %1592 = vmatpush1.msra.mxu0 0.0
        %1593 = vmatprep.subr.mxu0 0.0
        %1594 = vmatpush1.msra.mxu0 0.0
        %1595 = vmatprep.subr.mxu0 0.0
        %1596 = vmatpush1.msra.mxu0 0.0
        %1597 = vmatprep.subr.mxu0 0.0
        %1598 = vmatpush1.msra.mxu0 0.0
        %1599 = vmatprep.subr.mxu0 0.0
        %1600 = vmatpush1.msra.mxu0 0.0
        %1601 = vmatprep.subr.mxu0 0.0
        %1602 = vmatpush1.msra.mxu0 0.0
        %1603 = vmatprep.subr.mxu0 0.0
        %1604 = vmatpush1.msra.mxu0 0.0
        %1605 = vmatprep.subr.mxu0 0.0
        %1606 = vmatpush1.msra.mxu0 0.0
        %1607 = vmatprep.subr.mxu0 0.0
        %1608 = vmatpush1.msra.mxu0 0.0
        %1609 = vmatprep.subr.mxu0 0.0
        %1610 = vmatpush1.msra.mxu0 0.0
        %1611 = vmatprep.subr.mxu0 0.0
        %1612 = vmatpush1.msra.mxu0 0.0
        %1613 = vmatprep.subr.mxu0 0.0
        %1614 = vmatpush1.msra.mxu0 0.0
        %1615 = vmatprep.subr.mxu0 0.0
        %1616 = vmatpush1.msra.mxu0 0.0
        %1617 = vmatprep.subr.mxu0 0.0
        %1618 = vmatpush1.msra.mxu0 0.0
        %1619 = vmatprep.mubr.f32.mxu0 0.0
        %1620 = vmatmul.mubr.f32.gmra.mrb[0].mxu0 %v1553
        %v1621 = vpop.f32.mrb[0].mxu0
        %v1622 = vadd.f32 0.0, %v1621
        %v1623 = vpop.f32.mrb[0].mxu0
        %1624 = vdwg.mxu0
        %1626 = vrot.lane.b32.xlu0 %v1290, 8
        %v1627 = vpop.permute.xlu0 %1626
        %1630 = vrot.lane.b32.xlu0 %v1460, 16
        %v1631 = vpop.permute.xlu0 %1630
        %1634 = vrot.lane.b32.xlu0 %v1622, 24
        %v1635 = vpop.permute.xlu0 %1634
        %v1637 = vsel %vm967, %v1128, %v1627
        %v1638 = vsel %vm886, %v1637, %v1631
        %vm1639 = vcmask 195584
        %v1640 = vsel %vm1639, %v1638, %v1635
        %v1641 = vld [vmem:[%s8] sm:$0xff]
        %v1642 = vld [vmem:[%s8 + $0x8] sm:$0xff]
        %v1643 = vld [vmem:[%s8 + $0x10] sm:$0xff]
        %v1644 = vld [vmem:[%s8 + $0x18] sm:$0xff]
        %v1645 = vld [vmem:[%s534] sm:$0xff]
        %v1647 = vsel %vm547, %v1640, 0
        %v1650 = vsel %vm547, %v1641, 0
        %v1653 = vsel %vm547, %v1642, 0
        %v1656 = vsel %vm547, %v1643, 0
        %v1659 = vsel %vm547, %v1644, 0
        %1661 = vmatprep.subr.mxu0 0.0
        %1662 = vmatpush1.xpose.msra.mxu0 %v1650
        %1663 = vmatprep.subr.mxu0 0.0
        %1664 = vmatpush1.xpose.msra.mxu0 %v1653
        %1665 = vmatprep.subr.mxu0 0.0
        %1666 = vmatpush1.xpose.msra.mxu0 %v1656
        %1667 = vmatprep.subr.mxu0 0.0
        %1668 = vmatpush1.xpose.msra.mxu0 %v1659
        %1669 = vmatprep.subr.mxu0 0.0
        %1670 = vmatpush1.xpose.msra.mxu0 0.0
        %1671 = vmatprep.subr.mxu0 0.0
        %1672 = vmatpush1.xpose.msra.mxu0 0.0
        %1673 = vmatprep.subr.mxu0 0.0
        %1674 = vmatpush1.xpose.msra.mxu0 0.0
        %1675 = vmatprep.subr.mxu0 0.0
        %1676 = vmatpush1.xpose.msra.mxu0 0.0
        %1677 = vmatprep.subr.mxu0 0.0
        %1678 = vmatpush1.xpose.msra.mxu0 0.0
        %1679 = vmatprep.subr.mxu0 0.0
        %1680 = vmatpush1.xpose.msra.mxu0 0.0
        %1681 = vmatprep.subr.mxu0 0.0
        %1682 = vmatpush1.xpose.msra.mxu0 0.0
        %1683 = vmatprep.subr.mxu0 0.0
        %1684 = vmatpush1.xpose.msra.mxu0 0.0
        %1685 = vmatprep.subr.mxu0 0.0
        %1686 = vmatpush1.xpose.msra.mxu0 0.0
        %1687 = vmatprep.subr.mxu0 0.0
        %1688 = vmatpush1.xpose.msra.mxu0 0.0
        %1689 = vmatprep.subr.mxu0 0.0
        %1690 = vmatpush1.xpose.msra.mxu0 0.0
        %1691 = vmatprep.subr.mxu0 0.0
        %1692 = vmatpush1.xpose.msra.mxu0 0.0
        %1693 = vmatprep.subr.mxu0 0.0
        %1694 = vmatpush1.xpose.msra.mxu0 0.0
        %1695 = vmatprep.subr.mxu0 0.0
        %1696 = vmatpush1.xpose.msra.mxu0 0.0
        %1697 = vmatprep.subr.mxu0 0.0
        %1698 = vmatpush1.xpose.msra.mxu0 0.0
        %1699 = vmatprep.subr.mxu0 0.0
        %1700 = vmatpush1.xpose.msra.mxu0 0.0
        %1701 = vmatprep.subr.mxu0 0.0
        %1702 = vmatpush1.xpose.msra.mxu0 0.0
        %1703 = vmatprep.subr.mxu0 0.0
        %1704 = vmatpush1.xpose.msra.mxu0 0.0
        %1705 = vmatprep.subr.mxu0 0.0
        %1706 = vmatpush1.xpose.msra.mxu0 0.0
        %1707 = vmatprep.subr.mxu0 0.0
        %1708 = vmatpush1.xpose.msra.mxu0 0.0
        %1709 = vmatprep.subr.mxu0 0.0
        %1710 = vmatpush1.xpose.msra.mxu0 0.0
        %1711 = vmatprep.subr.mxu0 0.0
        %1712 = vmatpush1.xpose.msra.mxu0 0.0
        %1713 = vmatprep.subr.mxu0 0.0
        %1714 = vmatpush1.xpose.msra.mxu0 0.0
        %1715 = vmatprep.subr.mxu0 0.0
        %1716 = vmatpush1.xpose.msra.mxu0 0.0
        %1717 = vmatprep.subr.mxu0 0.0
        %1718 = vmatpush1.xpose.msra.mxu0 0.0
        %1719 = vmatprep.subr.mxu0 0.0
        %1720 = vmatpush1.xpose.msra.mxu0 0.0
        %1721 = vmatprep.subr.mxu0 0.0
        %1722 = vmatpush1.xpose.msra.mxu0 0.0
        %1723 = vmatprep.subr.mxu0 0.0
        %1724 = vmatpush1.xpose.msra.mxu0 0.0
        %1725 = vmatprep.mubr.f32.mxu0 0.0
        %1726 = vmatmul.mubr.f32.gmra.mrb[0].mxu0 %v1647
        %v1727 = vpop.f32.mrb[0].mxu0
        %v1728 = vadd.f32 %v1645, %v1727
        %v1729 = vpop.f32.mrb[0].mxu0
        %1730 = vdwg.mxu0
        %1731 = vst.msk [vmem:[%s505] sm:$0xff] %vm547, %v1728
        %1732 = vst.msk [vmem:[%s519] sm:$0xff] %vm967, %v961
        %1733 = vst.msk [vmem:[%s526] sm:$0xff] %vm967, %v800
        %s1735 = scalar_lea.vmem %s519, 8 [#allocation6]
        %1736 = vst.msk [vmem:[%s1735] sm:$0xff] %vm967, %v1296
        %s1737 = scalar_lea.vmem %s526, 8 [#allocation7]
        %1738 = vst.msk [vmem:[%s1737] sm:$0xff] %vm967, %v1388
        %s1739 = sand.u32 %s306, 1
        %s1740 = scalar_lea.sflag [#allocation3], %s1739
        %s1741 = sand.u32 %s306, 1
        %s1742 = smul.addr %s1741, 8
        %s1743 = scalar_lea.vmem [#allocation2], %s1742
        %s1744 = sand.u32 %s36, 1
        %s1745 = scalar_lea.sflag [#allocation5], %s1744
        %s1746 = sand.u32 %s332, 1
        %s1747 = smul.addr %s1746, 32
        %s1748 = scalar_lea.vmem [#allocation4], %s1747
        %s1749 = sand.u32 %s36, 1
        %s1750 = scalar_lea.sflag [#allocation5], %s1749
        %s1751 = sand.u32 %s358, 1
        %s1752 = smul.addr %s1751, 16
        %s1753 = scalar_lea.vmem [#allocation6], %s1752
        %s1754 = sand.u32 %s384, 1
        %s1755 = scalar_lea.sflag [#allocation8], %s1754
        %s1756 = sand.u32 %s384, 1
        %s1757 = smul.addr %s1756, 16
        %s1758 = scalar_lea.vmem [#allocation7], %s1757
        // Predicated region
        $region69: #{_qwen2_attn_forward.1} parent=67 // pred_check
          %p1759 = pneg %p316
        $region70: #{_qwen2_attn_forward.1} parent=67 // pred_check_branch
          %1761 = sbr.rel (%p1759) target = $region72
        $region71: #{_qwen2_attn_forward.1} parent=67 // pred_region
          %s1763 = ssub.s32 128, 128
          %1764 = vsyncadd %s1740, %s1763
          %s1765 = smul.addr %s36, 128
          %s1766 = scalar_lea.hbm %s12, %s1765
          %s1768 = sshll.u32 %s1743, 4
          %s1769 = int_to_ptr.vmem [resolvable:$true] %s1768
          %1771 = dma.vmem_to_hbm [thread:$0]  %s1769, 128, %s1766, %s1740
        $region72: #{_qwen2_attn_forward.1} parent=67 // pred_fallthru
          _
        // Predicated region
        $region73: #{_qwen2_attn_forward.1} parent=67 // pred_check
          %p1772 = pneg %p342
        $region74: #{_qwen2_attn_forward.1} parent=67 // pred_check_branch
          %1774 = sbr.rel (%p1772) target = $region76
        $region75: #{_qwen2_attn_forward.1} parent=67 // pred_region
          %s1776 = ssub.s32 512, 512
          %1777 = vsyncadd %s1745, %s1776
          %s1778 = smul.addr %s36, 4
          %s1779 = smul.addr %s1778, 128
          %s1780 = scalar_lea.hbm %s13, %s1779
          %s1781 = sshll.u32 %s1748, 4
          %s1782 = int_to_ptr.vmem [resolvable:$true] %s1781
          %1787 = dma.vmem_to_hbm [thread:$0]  %s1782, 512, %s1780, %s1745, 128, 128, 8
        $region76: #{_qwen2_attn_forward.1} parent=67 // pred_fallthru
          _
        // Predicated region
        $region77: #{_qwen2_attn_forward.1} parent=67 // pred_check
          %p1788 = pneg %p368
        $region78: #{_qwen2_attn_forward.1} parent=67 // pred_check_branch
          %1790 = sbr.rel (%p1788) target = $region80
        $region79: #{_qwen2_attn_forward.1} parent=67 // pred_region
          %s1792 = ssub.s32 256, 256
          %1793 = vsyncadd %s1750, %s1792
          %s1794 = smul.addr %s36, 2
          %s1795 = smul.addr %s1794, 128
          %s1796 = scalar_lea.hbm %s14, %s1795
          %s1797 = sshll.u32 %s1753, 4
          %s1798 = int_to_ptr.vmem [resolvable:$true] %s1797
          %1803 = dma.vmem_to_hbm [thread:$0]  %s1798, 256, %s1796, %s1750, 128, 128, 8
        $region80: #{_qwen2_attn_forward.1} parent=67 // pred_fallthru
          _
        // Predicated region
        $region81: #{_qwen2_attn_forward.1} parent=67 // pred_check
          %p1804 = pneg %p394
        $region82: #{_qwen2_attn_forward.1} parent=67 // pred_check_branch
          %1806 = sbr.rel (%p1804) target = $region84
        $region83: #{_qwen2_attn_forward.1} parent=67 // pred_region
          %s1808 = ssub.s32 256, 256
          %1809 = vsyncadd %s1755, %s1808
          %s1810 = smul.addr %s36, 2
          %s1811 = smul.addr %s1810, 128
          %s1812 = scalar_lea.hbm %s15, %s1811
          %s1813 = sshll.u32 %s1758, 4
          %s1814 = int_to_ptr.vmem [resolvable:$true] %s1813
          %1819 = dma.vmem_to_hbm [thread:$0]  %s1814, 256, %s1812, %s1755, 128, 128, 8
        $region84: #{_qwen2_attn_forward.1} parent=67 // pred_fallthru
          _
      $region68: #{_qwen2_attn_forward.1} parent=5 // pred_fallthru
        _
      %p1820 = scmp.le.s32.totalorder 2, %s31
      // Predicated region
      $region85: #{_qwen2_attn_forward.1} parent=5 // pred_check
        %p1821 = pneg %p1820
      $region86: #{_qwen2_attn_forward.1} parent=5 // pred_check_branch
        %1823 = sbr.rel (%p1821) target = $region88
      $region87: #{_qwen2_attn_forward.1} parent=5 // pred_region
        %s1824 = ssub.s32 %s31, 2
        // Predicated region
        $region89: #{_qwen2_attn_forward.1} parent=87 // pred_check
          %p1825 = pneg %p322
        $region90: #{_qwen2_attn_forward.1} parent=87 // pred_check_branch
          %1827 = sbr.rel (%p1825) target = $region92
        $region91: #{_qwen2_attn_forward.1} parent=87 // pred_region
          %s1828 = sand.u32 %s307, 1
          %s1829 = scalar_lea.sflag [#allocation3], %s1828
          %s1830 = sand.u32 %s307, 1
          %s1831 = smul.addr %s1830, 8
          %s1832 = scalar_lea.vmem [#allocation2], %s1831
          %1833 = dma.done %s1829, 128
        $region92: #{_qwen2_attn_forward.1} parent=87 // pred_fallthru
          _
        // Predicated region
        $region93: #{_qwen2_attn_forward.1} parent=87 // pred_check
          %p1834 = pneg %p348
        $region94: #{_qwen2_attn_forward.1} parent=87 // pred_check_branch
          %1836 = sbr.rel (%p1834) target = $region96
        $region95: #{_qwen2_attn_forward.1} parent=87 // pred_region
          %s1837 = sand.u32 %s37, 1
          %s1838 = scalar_lea.sflag [#allocation5], %s1837
          %s1839 = sand.u32 %s333, 1
          %s1840 = smul.addr %s1839, 32
          %s1841 = scalar_lea.vmem [#allocation4], %s1840
          %1842 = dma.done %s1838, 512
        $region96: #{_qwen2_attn_forward.1} parent=87 // pred_fallthru
          _
        // Predicated region
        $region97: #{_qwen2_attn_forward.1} parent=87 // pred_check
          %p1843 = pneg %p374
        $region98: #{_qwen2_attn_forward.1} parent=87 // pred_check_branch
          %1845 = sbr.rel (%p1843) target = $region100
        $region99: #{_qwen2_attn_forward.1} parent=87 // pred_region
          %s1846 = sand.u32 %s37, 1
          %s1847 = scalar_lea.sflag [#allocation5], %s1846
          %s1848 = sand.u32 %s359, 1
          %s1849 = smul.addr %s1848, 16
          %s1850 = scalar_lea.vmem [#allocation6], %s1849
          %1851 = dma.done %s1847, 256
        $region100: #{_qwen2_attn_forward.1} parent=87 // pred_fallthru
          _
        // Predicated region
        $region101: #{_qwen2_attn_forward.1} parent=87 // pred_check
          %p1852 = pneg %p400
        $region102: #{_qwen2_attn_forward.1} parent=87 // pred_check_branch
          %1854 = sbr.rel (%p1852) target = $region104
        $region103: #{_qwen2_attn_forward.1} parent=87 // pred_region
          %s1855 = sand.u32 %s385, 1
          %s1856 = scalar_lea.sflag [#allocation8], %s1855
          %s1857 = sand.u32 %s385, 1
          %s1858 = smul.addr %s1857, 16
          %s1859 = scalar_lea.vmem [#allocation7], %s1858
          %1860 = dma.done %s1856, 256
        $region104: #{_qwen2_attn_forward.1} parent=87 // pred_fallthru
          _
      $region88: #{_qwen2_attn_forward.1} parent=5 // pred_fallthru
        _
    $region6: #{_qwen2_attn_forward.1} parent=1 // loop_footer
      %s35 = sadd.s32 1, %s31
    $region7: #{_qwen2_attn_forward.1} parent=1 // loop_footer_branch
      %30 = sbr.rel target = $region3
    $region8: #{_qwen2_attn_forward.1} parent=1 // loop_exit
      _
    %1861 = vsyncpa [#allocation3], 1
    %s1862 = scalar_lea.sflag [#allocation3], 1
    %1863 = vsyncpa %s1862, 1
    %1864 = vsyncpa [#allocation5], 1
    %s1865 = scalar_lea.sflag [#allocation5], 1
    %1866 = vsyncpa %s1865, 1
    %1867 = vsyncpa [#allocation8], 1
    %s1868 = scalar_lea.sflag [#allocation8], 1
    %1869 = vsyncpa %s1868, 1

</llo_original>
